<compile_context>
chip_gen: v6e
topology: v6e:2x2x1
jax: 0.10.0
libtpu: 0.0.40
codegen_flags: <defaults>
</compile_context>

<pallas_src>
import math
from functools import partial

import jax
import jax.numpy as jnp
from jax.experimental import pallas as pl
from jax.experimental.pallas import tpu as pltpu

NUM_HEADS = 4
LN_EPS = 1e-5            # PyTorch nn.LayerNorm default
MASK_NEG = -1e30         # finite "minus infinity" for key-padding mask


def _layer_norm(h, g, b):
    mu = jnp.mean(h, axis=-1, keepdims=True)
    var = jnp.mean((h - mu) ** 2, axis=-1, keepdims=True)
    return (h - mu) * jax.lax.rsqrt(var + LN_EPS) * g + b


def _gelu_tanh(u):
    # TODO(synk): tanh-approximate GELU (runs on EUP) instead of PyTorch's exact erf GELU
    # (~1e-3 abs difference).
    c = math.sqrt(2.0 / math.pi)
    return 0.5 * u * (1.0 + jnp.tanh(c * (u + 0.044715 * u * u * u)))


def _encoder_layer_kernel(num_heads, share_qk, *refs):
    if share_qk:
        (xq_ref, neg_ref,
         wq_ref, bq_ref, wk_ref, bk_ref, wv_ref, bv_ref, wo_ref, bo_ref,
         w1_ref, b1_ref, w2_ref, b2_ref,
         ln0g_ref, ln0b_ref, ln1g_ref, ln1b_ref, o_ref) = refs
        xk_ref = xq_ref
    else:
        (xq_ref, xk_ref, neg_ref,
         wq_ref, bq_ref, wk_ref, bk_ref, wv_ref, bv_ref, wo_ref, bo_ref,
         w1_ref, b1_ref, w2_ref, b2_ref,
         ln0g_ref, ln0b_ref, ln1g_ref, ln1b_ref, o_ref) = refs

    TQ, E = xq_ref.shape
    Sk = xk_ref.shape[0]
    H = num_heads
    bf16 = jnp.bfloat16

    xq = xq_ref[...]                                               # (TQ, E) f32
    hq = _layer_norm(xq, ln0g_ref[...], ln0b_ref[...])
    hq_b = jnp.broadcast_to(hq.astype(bf16)[None], (H, TQ, E))

    if share_qk:
        hk_b = hq_b                                                # skip duplicate LayerNorm
    else:
        hk = _layer_norm(xk_ref[...], ln0g_ref[...], ln0b_ref[...])
        hk_b = jnp.broadcast_to(hk.astype(bf16)[None], (H, Sk, E))

    # ---- per-head projections as leading-batch einsums (weights are (H, E, Dh)) ----
    # 1/sqrt(Dh) is already folded into wq/bq.
    q = jnp.einsum('hqe,hed->hqd', hq_b, wq_ref[...],
                   preferred_element_type=jnp.float32) + bq_ref[...]        # (H, TQ, Dh)
    k = jnp.einsum('hke,hed->hkd', hk_b, wk_ref[...],
                   preferred_element_type=jnp.float32) + bk_ref[...]        # (H, Sk, Dh)
    v = jnp.einsum('hke,hed->hkd', hk_b, wv_ref[...],
                   preferred_element_type=jnp.float32) + bv_ref[...]        # (H, Sk, Dh)

    # ---- scores + key-padding bias + softmax ----
    s = jnp.einsum('hqd,hkd->hqk', q.astype(bf16), k.astype(bf16),
                   preferred_element_type=jnp.float32)                      # (H, TQ, Sk)
    s = s + neg_ref[...][None]                                              # (1, 1, Sk)
    s = s - jnp.max(s, axis=-1, keepdims=True)
    p = jnp.exp(s)
    p = p * pl.reciprocal(jnp.sum(p, axis=-1, keepdims=True), approx=True)  # attn_dropout = id

    ctx = jnp.einsum('hqk,hkd->hqd', p.astype(bf16), v.astype(bf16),
                     preferred_element_type=jnp.float32)                    # (H, TQ, Dh)

    # ---- output projection: sum_h ctx_h @ Wo_h  (Wo prepared as (H, Dh, E)) ----
    part = jnp.einsum('hqd,hde->hqe', ctx.astype(bf16), wo_ref[...],
                      preferred_element_type=jnp.float32)                   # (H, TQ, E)
    attn = jnp.sum(part, axis=0) + bo_ref[...]                              # (TQ, E)

    h1 = xq + attn                                  # residual (res_dropout = identity)

    # ---- pre-norm feed-forward ----
    g = _layer_norm(h1, ln1g_ref[...], ln1b_ref[...])
    f = jnp.dot(g.astype(bf16), w1_ref[...],
                preferred_element_type=jnp.float32) + b1_ref[...]
    f = _gelu_tanh(f)                               # activ_dropout = identity
    f = jnp.dot(f.astype(bf16), w2_ref[...],
                preferred_element_type=jnp.float32) + b2_ref[...]

    # TODO(synk): for embed_dim < 128 the output stores are lane-masked; padding E to 128
    # (with a masked LayerNorm) would make them lane-dense for production sizes.
    o_ref[...] = (h1 + f).astype(o_ref.dtype)


def init_params(key, embed_dim):
    """Matches the module's init: xavier_uniform weights, zero biases, LN weight=1/bias=0."""
    E = embed_dim
    ks = jax.random.split(key, 4)

    def xavier(k, fan_out, fan_in):
        bound = math.sqrt(6.0 / (fan_in + fan_out))
        return jax.random.uniform(k, (fan_out, fan_in), jnp.float32, -bound, bound)

    in_proj_w = xavier(ks[0], 3 * E, E)          # torch in_proj_weight (3E, E)
    out_proj_w = xavier(ks[1], E, E)
    fc1_w = xavier(ks[2], 4 * E, E)
    fc2_w = xavier(ks[3], E, 4 * E)

    z = lambda n: jnp.zeros((1, n), jnp.float32)
    return dict(
        wq_t=in_proj_w[0:E].T, wk_t=in_proj_w[E:2 * E].T, wv_t=in_proj_w[2 * E:3 * E].T,
        bq=z(E), bk=z(E), bv=z(E),
        wo_t=out_proj_w.T, bo=z(E),
        w1_t=fc1_w.T, b1=z(4 * E),
        w2_t=fc2_w.T, b2=z(E),
        ln0_g=jnp.ones((1, E), jnp.float32), ln0_b=z(E),
        ln1_g=jnp.ones((1, E), jnp.float32), ln1_b=z(E),
    )


def _prepare_kernel_params(params, E, H):
    """Host-side re-layout: per-head weights (head axis leading), bf16 MXU operands,
    1/sqrt(Dh) folded into the q projection."""
    Dh = E // H
    scale = 1.0 / math.sqrt(Dh)
    bf = lambda a: a.astype(jnp.bfloat16)
    to_heads_in = lambda w: jnp.transpose(w.reshape(E, H, Dh), (1, 0, 2))   # (H, E, Dh)
    return dict(
        wq_h=bf(to_heads_in(params['wq_t'] * scale)),
        wk_h=bf(to_heads_in(params['wk_t'])),
        wv_h=bf(to_heads_in(params['wv_t'])),
        bq_h=(params['bq'] * scale).reshape(H, 1, Dh),
        bk_h=params['bk'].reshape(H, 1, Dh),
        bv_h=params['bv'].reshape(H, 1, Dh),
        wo_h=bf(params['wo_t'].reshape(H, Dh, E)),                          # (H, Dh, E)
        bo=params['bo'],
        w1=bf(params['w1_t']), b1=params['b1'],
        w2=bf(params['w2_t']), b2=params['b2'],
        ln0_g=params['ln0_g'], ln0_b=params['ln0_b'],
        ln1_g=params['ln1_g'], ln1_b=params['ln1_b'],
    )


def _pick_row_tile(s):
    for t in (512, 256, 128):                    # >=256 preferred for v6e/v7x 256-wide MXU
        if s % t == 0:
            return t
    return s                                     # fall back to whole sequence


def transformer_encoder_layer_qkv(params, x_q, x_k=None, key_len=None, num_heads=NUM_HEADS):
    """x_q: (seq_len, batch, embed_dim); x_k optional (seq_len', batch, embed_dim);
    key_len optional (batch,) int lengths. Returns (seq_len, batch, embed_dim)."""
    xq = jnp.transpose(x_q, (1, 0, 2)).astype(jnp.float32)                  # (B, Sq, E)
    self_attn = x_k is None
    xk = xq if self_attn else jnp.transpose(x_k, (1, 0, 2)).astype(jnp.float32)
    B, Sq, E = xq.shape
    Sk = xk.shape[1]
    H = num_heads
    assert E % H == 0

    TQ = _pick_row_tile(Sq)
    n_q = Sq // TQ
    # Self-attention with a single query tile: keys == the query tile, reuse its LayerNorm
    # and skip the duplicate x_k input entirely.
    share_qk = self_attn and (n_q == 1)

    # Key-padding mask as an additive bias (finite large-negative avoids NaN rows).
    if key_len is None:
        neg = jnp.zeros((B, 1, Sk), jnp.float32)
    else:
        neg = jnp.where(jnp.arange(Sk)[None, :] >= key_len[:, None], MASK_NEG, 0.0)
        neg = neg.astype(jnp.float32).reshape(B, 1, Sk)

    kp = _prepare_kernel_params(params, E, H)
    weight_args = (kp['wq_h'], kp['bq_h'], kp['wk_h'], kp['bk_h'], kp['wv_h'], kp['bv_h'],
                   kp['wo_h'], kp['bo'], kp['w1'], kp['b1'], kp['w2'], kp['b2'],
                   kp['ln0_g'], kp['ln0_b'], kp['ln1_g'], kp['ln1_b'])

    # Weights: full-array blocks with constant index_map -> fetched once, VMEM-resident.
    def const_spec(shape):
        return pl.BlockSpec(shape, lambda b, qi, _n=len(shape): (0,) * _n)
    weight_specs = [const_spec(w.shape) for w in weight_args]

    xq_spec = pl.BlockSpec((None, TQ, E), lambda b, qi: (b, qi, 0))
    xk_spec = pl.BlockSpec((None, Sk, E), lambda b, qi: (b, 0, 0))
    # TODO(synk): the full key sequence is resident per batch; very long Sk would need a
    # flash-style streaming grid axis over keys.
    neg_spec = pl.BlockSpec((None, 1, Sk), lambda b, qi: (b, 0, 0))
    out_spec = pl.BlockSpec((None, TQ, E), lambda b, qi: (b, qi, 0))

    if share_qk:
        inputs = (xq, neg) + weight_args
        in_specs = [xq_spec, neg_spec] + weight_specs
    else:
        inputs = (xq, xk, neg) + weight_args
        in_specs = [xq_spec, xk_spec, neg_spec] + weight_specs

    cost = pl.CostEstimate(
        flops=int(B * (20 * Sq * E * E + 4 * Sk * E * E + 4 * Sq * Sk * E)),
        transcendentals=int(B * (H * Sq * Sk + 4 * Sq * E)),
        bytes_accessed=int(8 * B * Sq * E + 4 * B * Sk * (E + 1) + 24 * E * E + 72 * E),
    )

    out = pl.pallas_call(
        partial(_encoder_layer_kernel, H, share_qk),
        out_shape=jax.ShapeDtypeStruct((B, Sq, E), jnp.float32),
        grid=(B, n_q),
        in_specs=in_specs,
        out_specs=out_spec,
        compiler_params=pltpu.CompilerParams(
            dimension_semantics=("parallel", "parallel"),
            vmem_limit_bytes=48 * 1024 * 1024),
        cost_estimate=cost,
    )(*inputs)

    return jnp.transpose(out, (1, 0, 2))                                    # (Sq, B, E)


if __name__ == "__main__":
    key = jax.random.PRNGKey(0)
    kx, kp = jax.random.split(key)
    SEQ, BATCH, EMBED = 8, 2, 32                 # embed_dim=32, num_heads=4 -> head_dim=8
    x = jax.random.normal(kx, (SEQ, BATCH, EMBED), jnp.float32)
    params = init_params(kp, EMBED)

    # Self-attention path (x_k=None, key_len=None).
    out = transformer_encoder_layer_qkv(params, x)
    jax.block_until_ready(out)
    assert out.shape == (SEQ, BATCH, EMBED) and out.dtype == jnp.float32

    # Cross-attention path with a key-padding mask.
    x_k = jax.random.normal(jax.random.fold_in(kx, 1), (SEQ, BATCH, EMBED), jnp.float32)
    key_len = jnp.array([5, 8], jnp.int32)
    out2 = transformer_encoder_layer_qkv(params, x, x_k=x_k, key_len=key_len)
    jax.block_until_ready(out2)
    assert out2.shape == (SEQ, BATCH, EMBED) and out2.dtype == jnp.float32

    print("KERNEL_OK")
</pallas_src>

<mosaic_0001>
module attributes {stable_mosaic.version = 11 : i64} {
  func.func @_encoder_layer_kernel(%arg0: i32, %arg1: i32, %arg2: memref<1x8x32xf32, #tpu.memory_space<vmem>>, %arg3: memref<1x1x8xf32, #tpu.memory_space<vmem>>, %arg4: memref<4x32x8xbf16, #tpu.memory_space<vmem>>, %arg5: memref<4x1x8xf32, #tpu.memory_space<vmem>>, %arg6: memref<4x32x8xbf16, #tpu.memory_space<vmem>>, %arg7: memref<4x1x8xf32, #tpu.memory_space<vmem>>, %arg8: memref<4x32x8xbf16, #tpu.memory_space<vmem>>, %arg9: memref<4x1x8xf32, #tpu.memory_space<vmem>>, %arg10: memref<4x8x32xbf16, #tpu.memory_space<vmem>>, %arg11: memref<1x32xf32, #tpu.memory_space<vmem>>, %arg12: memref<32x128xbf16, #tpu.memory_space<vmem>>, %arg13: memref<1x128xf32, #tpu.memory_space<vmem>>, %arg14: memref<128x32xbf16, #tpu.memory_space<vmem>>, %arg15: memref<1x32xf32, #tpu.memory_space<vmem>>, %arg16: memref<1x32xf32, #tpu.memory_space<vmem>>, %arg17: memref<1x32xf32, #tpu.memory_space<vmem>>, %arg18: memref<1x32xf32, #tpu.memory_space<vmem>>, %arg19: memref<1x32xf32, #tpu.memory_space<vmem>>, %arg20: memref<1x8x32xf32, #tpu.memory_space<vmem>>) attributes {dimension_semantics = [#tpu.dimension_semantics<parallel>, #tpu.dimension_semantics<parallel>], iteration_bounds = array<i64: 2, 1>, scalar_prefetch = 0 : i64, scratch_operands = 0 : i64, tpu.core_type = #tpu.core_type<tc>, window_params = [{transform_indices = @transform_0, window_bounds = array<i64: 1, 8, 32>}, {transform_indices = @transform_1, window_bounds = array<i64: 1, 1, 8>}, {pipeline_mode = #tpu.pipeline_mode<synchronous>, transform_indices = @transform_2, window_bounds = array<i64: 4, 32, 8>}, {pipeline_mode = #tpu.pipeline_mode<synchronous>, transform_indices = @transform_3, window_bounds = array<i64: 4, 1, 8>}, {pipeline_mode = #tpu.pipeline_mode<synchronous>, transform_indices = @transform_4, window_bounds = array<i64: 4, 32, 8>}, {pipeline_mode = #tpu.pipeline_mode<synchronous>, transform_indices = @transform_5, window_bounds = array<i64: 4, 1, 8>}, {pipeline_mode = #tpu.pipeline_mode<synchronous>, transform_indices = @transform_6, window_bounds = array<i64: 4, 32, 8>}, {pipeline_mode = #tpu.pipeline_mode<synchronous>, transform_indices = @transform_7, window_bounds = array<i64: 4, 1, 8>}, {pipeline_mode = #tpu.pipeline_mode<synchronous>, transform_indices = @transform_8, window_bounds = array<i64: 4, 8, 32>}, {pipeline_mode = #tpu.pipeline_mode<synchronous>, transform_indices = @transform_9, window_bounds = array<i64: 1, 32>}, {pipeline_mode = #tpu.pipeline_mode<synchronous>, transform_indices = @transform_10, window_bounds = array<i64: 32, 128>}, {pipeline_mode = #tpu.pipeline_mode<synchronous>, transform_indices = @transform_11, window_bounds = array<i64: 1, 128>}, {pipeline_mode = #tpu.pipeline_mode<synchronous>, transform_indices = @transform_12, window_bounds = array<i64: 128, 32>}, {pipeline_mode = #tpu.pipeline_mode<synchronous>, transform_indices = @transform_13, window_bounds = array<i64: 1, 32>}, {pipeline_mode = #tpu.pipeline_mode<synchronous>, transform_indices = @transform_14, window_bounds = array<i64: 1, 32>}, {pipeline_mode = #tpu.pipeline_mode<synchronous>, transform_indices = @transform_15, window_bounds = array<i64: 1, 32>}, {pipeline_mode = #tpu.pipeline_mode<synchronous>, transform_indices = @transform_16, window_bounds = array<i64: 1, 32>}, {pipeline_mode = #tpu.pipeline_mode<synchronous>, transform_indices = @transform_17, window_bounds = array<i64: 1, 32>}, {transform_indices = @transform_18, window_bounds = array<i64: 1, 8, 32>}]} {
    %c0 = arith.constant 0 : index
    %c0_0 = arith.constant 0 : index
    %c0_1 = arith.constant 0 : index
    %0 = vector.load %arg2[%c0, %c0_0, %c0_1] : memref<1x8x32xf32, #tpu.memory_space<vmem>>, vector<1x8x32xf32>
    %1 = vector.shape_cast %0 : vector<1x8x32xf32> to vector<8x32xf32>
    %c0_2 = arith.constant 0 : index
    %c0_3 = arith.constant 0 : index
    %2 = vector.load %arg16[%c0_2, %c0_3] : memref<1x32xf32, #tpu.memory_space<vmem>>, vector<1x32xf32>
    %c0_4 = arith.constant 0 : index
    %c0_5 = arith.constant 0 : index
    %3 = vector.load %arg17[%c0_4, %c0_5] : memref<1x32xf32, #tpu.memory_space<vmem>>, vector<1x32xf32>
    %cst = arith.constant dense<0.000000e+00> : vector<8xf32>
    %4 = vector.multi_reduction <add>, %1, %cst [1] : vector<8x32xf32> to vector<8xf32>
    %5 = vector.shape_cast %4 : vector<8xf32> to vector<8x1xf32>
    %cst_6 = arith.constant 3.200000e+01 : f32
    %6 = vector.broadcast %cst_6 : f32 to vector<8x1xf32>
    %7 = arith.divf %5, %6 : vector<8x1xf32>
    %8 = vector.broadcast %7 : vector<8x1xf32> to vector<8x32xf32>
    %9 = arith.subf %1, %8 : vector<8x32xf32>
    %10 = arith.mulf %9, %9 : vector<8x32xf32>
    %cst_7 = arith.constant dense<0.000000e+00> : vector<8xf32>
    %11 = vector.multi_reduction <add>, %10, %cst_7 [1] : vector<8x32xf32> to vector<8xf32>
    %12 = vector.shape_cast %11 : vector<8xf32> to vector<8x1xf32>
    %cst_8 = arith.constant 3.200000e+01 : f32
    %13 = vector.broadcast %cst_8 : f32 to vector<8x1xf32>
    %14 = arith.divf %12, %13 : vector<8x1xf32>
    %15 = vector.broadcast %7 : vector<8x1xf32> to vector<8x32xf32>
    %16 = arith.subf %1, %15 : vector<8x32xf32>
    %cst_9 = arith.constant 9.99999974E-6 : f32
    %17 = vector.broadcast %cst_9 : f32 to vector<8x1xf32>
    %18 = arith.addf %14, %17 : vector<8x1xf32>
    %19 = math.rsqrt %18 : vector<8x1xf32>
    %20 = vector.broadcast %19 : vector<8x1xf32> to vector<8x32xf32>
    %21 = arith.mulf %16, %20 : vector<8x32xf32>
    %22 = vector.broadcast %2 : vector<1x32xf32> to vector<8x32xf32>
    %23 = arith.mulf %21, %22 : vector<8x32xf32>
    %24 = vector.broadcast %3 : vector<1x32xf32> to vector<8x32xf32>
    %25 = arith.addf %23, %24 : vector<8x32xf32>
    %26 = arith.truncf %25 : vector<8x32xf32> to vector<8x32xbf16>
    %27 = vector.shape_cast %26 : vector<8x32xbf16> to vector<1x8x32xbf16>
    %28 = vector.shape_cast %27 : vector<1x8x32xbf16> to vector<1x8x32xbf16>
    %29 = vector.broadcast %28 : vector<1x8x32xbf16> to vector<4x8x32xbf16>
    %c0_10 = arith.constant 0 : index
    %c0_11 = arith.constant 0 : index
    %c0_12 = arith.constant 0 : index
    %30 = vector.load %arg4[%c0_10, %c0_11, %c0_12] : memref<4x32x8xbf16, #tpu.memory_space<vmem>>, vector<4x32x8xbf16>
    "tpu.trace_start"() <{level = 10 : i32, message = "hqe,hed->hqd"}> : () -> ()
    %cst_13 = arith.constant dense<0.000000e+00> : vector<4x8x8xf32>
    %31 = tpu.matmul %29, %30, %cst_13 {dimension_numbers = #tpu.dot_dimension_numbers<[2], [1], [1], [2], [0, 0, 0, 1, 1, 2], [0], [0]>} : vector<4x8x32xbf16>, vector<4x32x8xbf16>, vector<4x8x8xf32> -> vector<4x8x8xf32>
    "tpu.trace_stop"() : () -> ()
    %c0_14 = arith.constant 0 : index
    %c0_15 = arith.constant 0 : index
    %c0_16 = arith.constant 0 : index
    %32 = vector.load %arg5[%c0_14, %c0_15, %c0_16] : memref<4x1x8xf32, #tpu.memory_space<vmem>>, vector<4x1x8xf32>
    %33 = vector.broadcast %32 : vector<4x1x8xf32> to vector<4x8x8xf32>
    %34 = arith.addf %31, %33 : vector<4x8x8xf32>
    %c0_17 = arith.constant 0 : index
    %c0_18 = arith.constant 0 : index
    %c0_19 = arith.constant 0 : index
    %35 = vector.load %arg6[%c0_17, %c0_18, %c0_19] : memref<4x32x8xbf16, #tpu.memory_space<vmem>>, vector<4x32x8xbf16>
    "tpu.trace_start"() <{level = 10 : i32, message = "hke,hed->hkd"}> : () -> ()
    %cst_20 = arith.constant dense<0.000000e+00> : vector<4x8x8xf32>
    %36 = tpu.matmul %29, %35, %cst_20 {dimension_numbers = #tpu.dot_dimension_numbers<[2], [1], [1], [2], [0, 0, 0, 1, 1, 2], [0], [0]>} : vector<4x8x32xbf16>, vector<4x32x8xbf16>, vector<4x8x8xf32> -> vector<4x8x8xf32>
    "tpu.trace_stop"() : () -> ()
    %c0_21 = arith.constant 0 : index
    %c0_22 = arith.constant 0 : index
    %c0_23 = arith.constant 0 : index
    %37 = vector.load %arg7[%c0_21, %c0_22, %c0_23] : memref<4x1x8xf32, #tpu.memory_space<vmem>>, vector<4x1x8xf32>
    %38 = vector.broadcast %37 : vector<4x1x8xf32> to vector<4x8x8xf32>
    %39 = arith.addf %36, %38 : vector<4x8x8xf32>
    %c0_24 = arith.constant 0 : index
    %c0_25 = arith.constant 0 : index
    %c0_26 = arith.constant 0 : index
    %40 = vector.load %arg8[%c0_24, %c0_25, %c0_26] : memref<4x32x8xbf16, #tpu.memory_space<vmem>>, vector<4x32x8xbf16>
    "tpu.trace_start"() <{level = 10 : i32, message = "hke,hed->hkd"}> : () -> ()
    %cst_27 = arith.constant dense<0.000000e+00> : vector<4x8x8xf32>
    %41 = tpu.matmul %29, %40, %cst_27 {dimension_numbers = #tpu.dot_dimension_numbers<[2], [1], [1], [2], [0, 0, 0, 1, 1, 2], [0], [0]>} : vector<4x8x32xbf16>, vector<4x32x8xbf16>, vector<4x8x8xf32> -> vector<4x8x8xf32>
    "tpu.trace_stop"() : () -> ()
    %c0_28 = arith.constant 0 : index
    %c0_29 = arith.constant 0 : index
    %c0_30 = arith.constant 0 : index
    %42 = vector.load %arg9[%c0_28, %c0_29, %c0_30] : memref<4x1x8xf32, #tpu.memory_space<vmem>>, vector<4x1x8xf32>
    %43 = vector.broadcast %42 : vector<4x1x8xf32> to vector<4x8x8xf32>
    %44 = arith.addf %41, %43 : vector<4x8x8xf32>
    %45 = arith.truncf %34 : vector<4x8x8xf32> to vector<4x8x8xbf16>
    %46 = arith.truncf %39 : vector<4x8x8xf32> to vector<4x8x8xbf16>
    "tpu.trace_start"() <{level = 10 : i32, message = "hqd,hkd->hqk"}> : () -> ()
    %cst_31 = arith.constant dense<0.000000e+00> : vector<4x8x8xf32>
    %47 = tpu.matmul %45, %46, %cst_31 {dimension_numbers = #tpu.dot_dimension_numbers<[2], [2], [1], [1], [0, 0, 0, 1, 1, 1], [0], [0]>} : vector<4x8x8xbf16>, vector<4x8x8xbf16>, vector<4x8x8xf32> -> vector<4x8x8xf32>
    "tpu.trace_stop"() : () -> ()
    %c0_32 = arith.constant 0 : index
    %c0_33 = arith.constant 0 : index
    %c0_34 = arith.constant 0 : index
    %48 = vector.load %arg3[%c0_32, %c0_33, %c0_34] : memref<1x1x8xf32, #tpu.memory_space<vmem>>, vector<1x1x8xf32>
    %49 = vector.shape_cast %48 : vector<1x1x8xf32> to vector<1x8xf32>
    %50 = vector.shape_cast %49 : vector<1x8xf32> to vector<1x1x8xf32>
    %51 = vector.broadcast %50 : vector<1x1x8xf32> to vector<4x8x8xf32>
    %52 = arith.addf %47, %51 : vector<4x8x8xf32>
    %cst_35 = arith.constant dense<0xFF800000> : vector<4x8xf32>
    %53 = vector.multi_reduction <maximumf>, %52, %cst_35 [2] : vector<4x8x8xf32> to vector<4x8xf32>
    %54 = vector.shape_cast %53 : vector<4x8xf32> to vector<4x8x1xf32>
    %55 = vector.broadcast %54 : vector<4x8x1xf32> to vector<4x8x8xf32>
    %56 = arith.subf %52, %55 : vector<4x8x8xf32>
    %57 = math.exp %56 : vector<4x8x8xf32>
    %cst_36 = arith.constant dense<0.000000e+00> : vector<4x8xf32>
    %58 = vector.multi_reduction <add>, %57, %cst_36 [2] : vector<4x8x8xf32> to vector<4x8xf32>
    %59 = vector.shape_cast %58 : vector<4x8xf32> to vector<4x8x1xf32>
    %60 = tpu.reciprocal %59 {approx = true} : vector<4x8x1xf32> -> vector<4x8x1xf32>
    %61 = vector.broadcast %60 : vector<4x8x1xf32> to vector<4x8x8xf32>
    %62 = arith.mulf %57, %61 : vector<4x8x8xf32>
    %63 = arith.truncf %62 : vector<4x8x8xf32> to vector<4x8x8xbf16>
    %64 = arith.truncf %44 : vector<4x8x8xf32> to vector<4x8x8xbf16>
    "tpu.trace_start"() <{level = 10 : i32, message = "hqk,hkd->hqd"}> : () -> ()
    %cst_37 = arith.constant dense<0.000000e+00> : vector<4x8x8xf32>
    %65 = tpu.matmul %63, %64, %cst_37 {dimension_numbers = #tpu.dot_dimension_numbers<[2], [1], [1], [2], [0, 0, 0, 1, 1, 2], [0], [0]>} : vector<4x8x8xbf16>, vector<4x8x8xbf16>, vector<4x8x8xf32> -> vector<4x8x8xf32>
    "tpu.trace_stop"() : () -> ()
    %66 = arith.truncf %65 : vector<4x8x8xf32> to vector<4x8x8xbf16>
    %c0_38 = arith.constant 0 : index
    %c0_39 = arith.constant 0 : index
    %c0_40 = arith.constant 0 : index
    %67 = vector.load %arg10[%c0_38, %c0_39, %c0_40] : memref<4x8x32xbf16, #tpu.memory_space<vmem>>, vector<4x8x32xbf16>
    "tpu.trace_start"() <{level = 10 : i32, message = "hqd,hde->hqe"}> : () -> ()
    %cst_41 = arith.constant dense<0.000000e+00> : vector<4x8x32xf32>
    %68 = tpu.matmul %66, %67, %cst_41 {dimension_numbers = #tpu.dot_dimension_numbers<[2], [1], [1], [2], [0, 0, 0, 1, 1, 2], [0], [0]>} : vector<4x8x8xbf16>, vector<4x8x32xbf16>, vector<4x8x32xf32> -> vector<4x8x32xf32>
    "tpu.trace_stop"() : () -> ()
    %cst_42 = arith.constant dense<0.000000e+00> : vector<8x32xf32>
    %69 = vector.multi_reduction <add>, %68, %cst_42 [0] : vector<4x8x32xf32> to vector<8x32xf32>
    %c0_43 = arith.constant 0 : index
    %c0_44 = arith.constant 0 : index
    %70 = vector.load %arg11[%c0_43, %c0_44] : memref<1x32xf32, #tpu.memory_space<vmem>>, vector<1x32xf32>
    %71 = vector.broadcast %70 : vector<1x32xf32> to vector<8x32xf32>
    %72 = arith.addf %69, %71 : vector<8x32xf32>
    %73 = arith.addf %1, %72 : vector<8x32xf32>
    %c0_45 = arith.constant 0 : index
    %c0_46 = arith.constant 0 : index
    %74 = vector.load %arg18[%c0_45, %c0_46] : memref<1x32xf32, #tpu.memory_space<vmem>>, vector<1x32xf32>
    %c0_47 = arith.constant 0 : index
    %c0_48 = arith.constant 0 : index
    %75 = vector.load %arg19[%c0_47, %c0_48] : memref<1x32xf32, #tpu.memory_space<vmem>>, vector<1x32xf32>
    %cst_49 = arith.constant dense<0.000000e+00> : vector<8xf32>
    %76 = vector.multi_reduction <add>, %73, %cst_49 [1] : vector<8x32xf32> to vector<8xf32>
    %77 = vector.shape_cast %76 : vector<8xf32> to vector<8x1xf32>
    %cst_50 = arith.constant 3.200000e+01 : f32
    %78 = vector.broadcast %cst_50 : f32 to vector<8x1xf32>
    %79 = arith.divf %77, %78 : vector<8x1xf32>
    %80 = vector.broadcast %79 : vector<8x1xf32> to vector<8x32xf32>
    %81 = arith.subf %73, %80 : vector<8x32xf32>
    %82 = arith.mulf %81, %81 : vector<8x32xf32>
    %cst_51 = arith.constant dense<0.000000e+00> : vector<8xf32>
    %83 = vector.multi_reduction <add>, %82, %cst_51 [1] : vector<8x32xf32> to vector<8xf32>
    %84 = vector.shape_cast %83 : vector<8xf32> to vector<8x1xf32>
    %cst_52 = arith.constant 3.200000e+01 : f32
    %85 = vector.broadcast %cst_52 : f32 to vector<8x1xf32>
    %86 = arith.divf %84, %85 : vector<8x1xf32>
    %87 = vector.broadcast %79 : vector<8x1xf32> to vector<8x32xf32>
    %88 = arith.subf %73, %87 : vector<8x32xf32>
    %cst_53 = arith.constant 9.99999974E-6 : f32
    %89 = vector.broadcast %cst_53 : f32 to vector<8x1xf32>
    %90 = arith.addf %86, %89 : vector<8x1xf32>
    %91 = math.rsqrt %90 : vector<8x1xf32>
    %92 = vector.broadcast %91 : vector<8x1xf32> to vector<8x32xf32>
    %93 = arith.mulf %88, %92 : vector<8x32xf32>
    %94 = vector.broadcast %74 : vector<1x32xf32> to vector<8x32xf32>
    %95 = arith.mulf %93, %94 : vector<8x32xf32>
    %96 = vector.broadcast %75 : vector<1x32xf32> to vector<8x32xf32>
    %97 = arith.addf %95, %96 : vector<8x32xf32>
    %98 = arith.truncf %97 : vector<8x32xf32> to vector<8x32xbf16>
    %c0_54 = arith.constant 0 : index
    %c0_55 = arith.constant 0 : index
    %99 = vector.load %arg12[%c0_54, %c0_55] : memref<32x128xbf16, #tpu.memory_space<vmem>>, vector<32x128xbf16>
    %cst_56 = arith.constant dense<0.000000e+00> : vector<8x128xf32>
    %100 = tpu.matmul %98, %99, %cst_56 {dimension_numbers = #tpu.dot_dimension_numbers<[1], [0], [0], [1], [0, 0, 1, 1], [], []>} : vector<8x32xbf16>, vector<32x128xbf16>, vector<8x128xf32> -> vector<8x128xf32>
    %c0_57 = arith.constant 0 : index
    %c0_58 = arith.constant 0 : index
    %101 = vector.load %arg13[%c0_57, %c0_58] : memref<1x128xf32, #tpu.memory_space<vmem>>, vector<1x128xf32>
    %102 = vector.broadcast %101 : vector<1x128xf32> to vector<8x128xf32>
    %103 = arith.addf %100, %102 : vector<8x128xf32>
    %cst_59 = arith.constant 5.000000e-01 : f32
    %104 = vector.broadcast %cst_59 : f32 to vector<8x128xf32>
    %105 = arith.mulf %104, %103 : vector<8x128xf32>
    %cst_60 = arith.constant 4.471500e-02 : f32
    %106 = vector.broadcast %cst_60 : f32 to vector<8x128xf32>
    %107 = arith.mulf %106, %103 : vector<8x128xf32>
    %108 = arith.mulf %107, %103 : vector<8x128xf32>
    %109 = arith.mulf %108, %103 : vector<8x128xf32>
    %110 = arith.addf %103, %109 : vector<8x128xf32>
    %cst_61 = arith.constant 0.797884583 : f32
    %111 = vector.broadcast %cst_61 : f32 to vector<8x128xf32>
    %112 = arith.mulf %111, %110 : vector<8x128xf32>
    %113 = math.tanh %112 : vector<8x128xf32>
    %cst_62 = arith.constant 1.000000e+00 : f32
    %114 = vector.broadcast %cst_62 : f32 to vector<8x128xf32>
    %115 = arith.addf %114, %113 : vector<8x128xf32>
    %116 = arith.mulf %105, %115 : vector<8x128xf32>
    %117 = arith.truncf %116 : vector<8x128xf32> to vector<8x128xbf16>
    %c0_63 = arith.constant 0 : index
    %c0_64 = arith.constant 0 : index
    %118 = vector.load %arg14[%c0_63, %c0_64] : memref<128x32xbf16, #tpu.memory_space<vmem>>, vector<128x32xbf16>
    %cst_65 = arith.constant dense<0.000000e+00> : vector<8x32xf32>
    %119 = tpu.matmul %117, %118, %cst_65 {dimension_numbers = #tpu.dot_dimension_numbers<[1], [0], [0], [1], [0, 0, 1, 1], [], []>} : vector<8x128xbf16>, vector<128x32xbf16>, vector<8x32xf32> -> vector<8x32xf32>
    %c0_66 = arith.constant 0 : index
    %c0_67 = arith.constant 0 : index
    %120 = vector.load %arg15[%c0_66, %c0_67] : memref<1x32xf32, #tpu.memory_space<vmem>>, vector<1x32xf32>
    %121 = vector.broadcast %120 : vector<1x32xf32> to vector<8x32xf32>
    %122 = arith.addf %119, %121 : vector<8x32xf32>
    %123 = arith.addf %73, %122 : vector<8x32xf32>
    %c0_68 = arith.constant 0 : index
    %c0_69 = arith.constant 0 : index
    %c0_70 = arith.constant 0 : index
    %124 = vector.load %arg20[%c0_68, %c0_69, %c0_70] : memref<1x8x32xf32, #tpu.memory_space<vmem>>, vector<1x8x32xf32>
    %125 = vector.shape_cast %124 : vector<1x8x32xf32> to vector<8x32xf32>
    %126 = vector.shape_cast %123 : vector<8x32xf32> to vector<1x8x32xf32>
    tpu.vector_store %arg20[%c0_68, %c0_69, %c0_70], %126 {strides = array<i32>} : memref<1x8x32xf32, #tpu.memory_space<vmem>>, vector<1x8x32xf32>,
    return
  }
  func.func @transform_0(%arg0: i32, %arg1: i32) -> (i32, i32, i32) {
    %c0_i32 = arith.constant 0 : i32
    %c0_i32_0 = arith.constant 0 : i32
    return %arg0, %arg1, %c0_i32 : i32, i32, i32
  }
  func.func @transform_1(%arg0: i32, %arg1: i32) -> (i32, i32, i32) {
    %c0_i32 = arith.constant 0 : i32
    %c0_i32_0 = arith.constant 0 : i32
    %c0_i32_1 = arith.constant 0 : i32
    return %arg0, %c0_i32, %c0_i32_0 : i32, i32, i32
  }
  func.func @transform_2(%arg0: i32, %arg1: i32) -> (i32, i32, i32) {
    %c0_i32 = arith.constant 0 : i32
    %c0_i32_0 = arith.constant 0 : i32
    %c0_i32_1 = arith.constant 0 : i32
    %c0_i32_2 = arith.constant 0 : i32
    return %c0_i32, %c0_i32_0, %c0_i32_1 : i32, i32, i32
  }
  func.func @transform_3(%arg0: i32, %arg1: i32) -> (i32, i32, i32) {
    %c0_i32 = arith.constant 0 : i32
    %c0_i32_0 = arith.constant 0 : i32
    %c0_i32_1 = arith.constant 0 : i32
    %c0_i32_2 = arith.constant 0 : i32
    return %c0_i32, %c0_i32_0, %c0_i32_1 : i32, i32, i32
  }
  func.func @transform_4(%arg0: i32, %arg1: i32) -> (i32, i32, i32) {
    %c0_i32 = arith.constant 0 : i32
    %c0_i32_0 = arith.constant 0 : i32
    %c0_i32_1 = arith.constant 0 : i32
    %c0_i32_2 = arith.constant 0 : i32
    return %c0_i32, %c0_i32_0, %c0_i32_1 : i32, i32, i32
  }
  func.func @transform_5(%arg0: i32, %arg1: i32) -> (i32, i32, i32) {
    %c0_i32 = arith.constant 0 : i32
    %c0_i32_0 = arith.constant 0 : i32
    %c0_i32_1 = arith.constant 0 : i32
    %c0_i32_2 = arith.constant 0 : i32
    return %c0_i32, %c0_i32_0, %c0_i32_1 : i32, i32, i32
  }
  func.func @transform_6(%arg0: i32, %arg1: i32) -> (i32, i32, i32) {
    %c0_i32 = arith.constant 0 : i32
    %c0_i32_0 = arith.constant 0 : i32
    %c0_i32_1 = arith.constant 0 : i32
    %c0_i32_2 = arith.constant 0 : i32
    return %c0_i32, %c0_i32_0, %c0_i32_1 : i32, i32, i32
  }
  func.func @transform_7(%arg0: i32, %arg1: i32) -> (i32, i32, i32) {
    %c0_i32 = arith.constant 0 : i32
    %c0_i32_0 = arith.constant 0 : i32
    %c0_i32_1 = arith.constant 0 : i32
    %c0_i32_2 = arith.constant 0 : i32
    return %c0_i32, %c0_i32_0, %c0_i32_1 : i32, i32, i32
  }
  func.func @transform_8(%arg0: i32, %arg1: i32) -> (i32, i32, i32) {
    %c0_i32 = arith.constant 0 : i32
    %c0_i32_0 = arith.constant 0 : i32
    %c0_i32_1 = arith.constant 0 : i32
    %c0_i32_2 = arith.constant 0 : i32
    return %c0_i32, %c0_i32_0, %c0_i32_1 : i32, i32, i32
  }
  func.func @transform_9(%arg0: i32, %arg1: i32) -> (i32, i32) {
    %c0_i32 = arith.constant 0 : i32
    %c0_i32_0 = arith.constant 0 : i32
    %c0_i32_1 = arith.constant 0 : i32
    return %c0_i32, %c0_i32_0 : i32, i32
  }
  func.func @transform_10(%arg0: i32, %arg1: i32) -> (i32, i32) {
    %c0_i32 = arith.constant 0 : i32
    %c0_i32_0 = arith.constant 0 : i32
    %c0_i32_1 = arith.constant 0 : i32
    return %c0_i32, %c0_i32_0 : i32, i32
  }
  func.func @transform_11(%arg0: i32, %arg1: i32) -> (i32, i32) {
    %c0_i32 = arith.constant 0 : i32
    %c0_i32_0 = arith.constant 0 : i32
    %c0_i32_1 = arith.constant 0 : i32
    return %c0_i32, %c0_i32_0 : i32, i32
  }
  func.func @transform_12(%arg0: i32, %arg1: i32) -> (i32, i32) {
    %c0_i32 = arith.constant 0 : i32
    %c0_i32_0 = arith.constant 0 : i32
    %c0_i32_1 = arith.constant 0 : i32
    return %c0_i32, %c0_i32_0 : i32, i32
  }
  func.func @transform_13(%arg0: i32, %arg1: i32) -> (i32, i32) {
    %c0_i32 = arith.constant 0 : i32
    %c0_i32_0 = arith.constant 0 : i32
    %c0_i32_1 = arith.constant 0 : i32
    return %c0_i32, %c0_i32_0 : i32, i32
  }
  func.func @transform_14(%arg0: i32, %arg1: i32) -> (i32, i32) {
    %c0_i32 = arith.constant 0 : i32
    %c0_i32_0 = arith.constant 0 : i32
    %c0_i32_1 = arith.constant 0 : i32
    return %c0_i32, %c0_i32_0 : i32, i32
  }
  func.func @transform_15(%arg0: i32, %arg1: i32) -> (i32, i32) {
    %c0_i32 = arith.constant 0 : i32
    %c0_i32_0 = arith.constant 0 : i32
    %c0_i32_1 = arith.constant 0 : i32
    return %c0_i32, %c0_i32_0 : i32, i32
  }
  func.func @transform_16(%arg0: i32, %arg1: i32) -> (i32, i32) {
    %c0_i32 = arith.constant 0 : i32
    %c0_i32_0 = arith.constant 0 : i32
    %c0_i32_1 = arith.constant 0 : i32
    return %c0_i32, %c0_i32_0 : i32, i32
  }
  func.func @transform_17(%arg0: i32, %arg1: i32) -> (i32, i32) {
    %c0_i32 = arith.constant 0 : i32
    %c0_i32_0 = arith.constant 0 : i32
    %c0_i32_1 = arith.constant 0 : i32
    return %c0_i32, %c0_i32_0 : i32, i32
  }
  func.func @transform_18(%arg0: i32, %arg1: i32) -> (i32, i32, i32) {
    %c0_i32 = arith.constant 0 : i32
    %c0_i32_0 = arith.constant 0 : i32
    return %arg0, %arg1, %c0_i32 : i32, i32, i32
  }
}

</mosaic_0001>

<llo_original>
// kernel: tpu_custom_call.1
$region0: #{tpu_custom_call.1}
  #allocation0 [shape = 'u32[]', space=smem, size = 0x4, offset = 0x4, fixed_abs, tag = 'smem constant byte address 0x4 - core index']
  #allocation1 [shape = 'u32[144,128]{1,0:T(1,128)}', space=vmem, size = 0x12000, scoped, tag = 'internal scratch']
  %s0 = inlined_call_operand.vmem [shape: f32[2,8,32], index: 0, kind: input, shape index: {}]
  %s1 = inlined_call_operand.vmem [shape: f32[2,1,8], index: 1, kind: input, shape index: {}]
  %s2 = inlined_call_operand.vmem [shape: bf16[4,32,8], index: 2, kind: input, shape index: {}]
  %s3 = inlined_call_operand.vmem [shape: f32[4,1,8], index: 3, kind: input, shape index: {}]
  %s4 = inlined_call_operand.vmem [shape: bf16[4,32,8], index: 4, kind: input, shape index: {}]
  %s5 = inlined_call_operand.vmem [shape: f32[4,1,8], index: 5, kind: input, shape index: {}]
  %s6 = inlined_call_operand.vmem [shape: bf16[4,32,8], index: 6, kind: input, shape index: {}]
  %s7 = inlined_call_operand.vmem [shape: f32[4,1,8], index: 7, kind: input, shape index: {}]
  %s8 = inlined_call_operand.vmem [shape: bf16[4,8,32], index: 8, kind: input, shape index: {}]
  %s9 = inlined_call_operand.vmem [shape: f32[1,32], index: 9, kind: input, shape index: {}]
  %s10 = inlined_call_operand.vmem [shape: bf16[32,128], index: 10, kind: input, shape index: {}]
  %s11 = inlined_call_operand.vmem [shape: f32[1,128], index: 11, kind: input, shape index: {}]
  %s12 = inlined_call_operand.vmem [shape: bf16[128,32], index: 12, kind: input, shape index: {}]
  %s13 = inlined_call_operand.vmem [shape: f32[1,32], index: 13, kind: input, shape index: {}]
  %s14 = inlined_call_operand.vmem [shape: f32[1,32], index: 14, kind: input, shape index: {}]
  %s15 = inlined_call_operand.vmem [shape: f32[1,32], index: 15, kind: input, shape index: {}]
  %s16 = inlined_call_operand.vmem [shape: f32[1,32], index: 16, kind: input, shape index: {}]
  %s17 = inlined_call_operand.vmem [shape: f32[1,32], index: 17, kind: input, shape index: {}]
  %s18 = inlined_call_operand.hbm [shape: f32[2,8,32], index: 18, kind: output, shape index: {}]
  %s19 = sld [smem:[#allocation0]]
  $region105: #{tpu_custom_call.1} parent=0
    _
  %s21 = ssub.s32 1, %s19
  %s22 = scalar_select 0, %s21, %s19
  $region1: #{tpu_custom_call.1} parent=0
    #allocation2 [shape = 'u8[8192]{0}', space=vmem, size = 0x2000, scoped, tag = 'output window, operand 0']
    #allocation3 [shape = 's32[2]{0}', space=sflag, size = 0x8, scoped, tag = 'scoped memory for tpu_custom_call.1']
    %23 = vsyncpa [#allocation3], 0
    %s24 = scalar_lea.sflag [#allocation3], 1
    %25 = vsyncpa %s24, 0
    loop: start=0, step=1, limit=4
    $region2: #{tpu_custom_call.1} parent=1 // loop_pre_header
      _
    $region3: #{tpu_custom_call.1} parent=1 // loop_header
      %s27 = sphi 0, %s31
      %p28 = scmp.ge.s32.totalorder %s27, 4
      %s34 = sphi 0, %s46
      %s35 = sphi 0, %s42
      %s36 = sphi 0, %s34
      %s37 = sphi 0, %s35
      %s38 = sphi 0, %s36
      %s39 = sphi 0, %s37
      %s51 = sphi 0, %s53
      %s54 = sphi 0, %s51
      %s55 = sphi 0, %s54
      %s71 = sphi 0, %s55
      %s77 = sphi 0, %s79
      %s80 = sphi 0, %s77
      %s81 = sphi 0, %s80
      %s97 = sphi 0, %s81
      %s101 = sphi 0, %s101
      %s103 = sphi 0, %s101
      %s104 = sphi 0, %s103
      %s118 = sphi 0, %s104
      %s122 = sphi 0, %s122
      %s124 = sphi 0, %s122
      %s125 = sphi 0, %s124
      %s139 = sphi 0, %s125
      %s143 = sphi 0, %s143
      %s145 = sphi 0, %s143
      %s146 = sphi 0, %s145
      %s160 = sphi 0, %s146
      %s164 = sphi 0, %s164
      %s166 = sphi 0, %s164
      %s167 = sphi 0, %s166
      %s181 = sphi 0, %s167
      %s185 = sphi 0, %s185
      %s187 = sphi 0, %s185
      %s188 = sphi 0, %s187
      %s202 = sphi 0, %s188
      %s206 = sphi 0, %s206
      %s208 = sphi 0, %s206
      %s209 = sphi 0, %s208
      %s223 = sphi 0, %s209
      %s227 = sphi 0, %s227
      %s229 = sphi 0, %s227
      %s230 = sphi 0, %s229
      %s244 = sphi 0, %s230
      %s248 = sphi 0, %s248
      %s250 = sphi 0, %s248
      %s251 = sphi 0, %s250
      %s265 = sphi 0, %s251
      %s269 = sphi 0, %s269
      %s271 = sphi 0, %s269
      %s272 = sphi 0, %s271
      %s286 = sphi 0, %s272
      %s290 = sphi 0, %s290
      %s292 = sphi 0, %s290
      %s293 = sphi 0, %s292
      %s307 = sphi 0, %s293
      %s311 = sphi 0, %s311
      %s313 = sphi 0, %s311
      %s314 = sphi 0, %s313
      %s328 = sphi 0, %s314
      %s332 = sphi 0, %s332
      %s334 = sphi 0, %s332
      %s335 = sphi 0, %s334
      %s349 = sphi 0, %s335
      %s353 = sphi 0, %s353
      %s355 = sphi 0, %s353
      %s356 = sphi 0, %s355
      %s370 = sphi 0, %s356
      %s374 = sphi 0, %s374
      %s376 = sphi 0, %s374
      %s377 = sphi 0, %s376
      %s391 = sphi 0, %s377
      %s395 = sphi 0, %s395
      %s397 = sphi 0, %s395
      %s398 = sphi 0, %s397
      %s412 = sphi 0, %s398
      %s416 = sphi 0, %s416
      %s418 = sphi 0, %s416
      %s419 = sphi 0, %s418
      %s433 = sphi 0, %s419
      %s441 = sphi 0, %s443
      %s444 = sphi 0, %s441
      %s445 = sphi 0, %s444
      %s461 = sphi 0, %s445
    $region4: #{tpu_custom_call.1} parent=1 // loop_header_branch
      %30 = sbr.rel (%p28) target = $region8
    $region5: #{tpu_custom_call.1} parent=1 // loop_body
      %s32 = ssub.s32 %s27, 1
      %s33 = ssub.s32 %s27, 2
      %s40 = sadd.s32 1, %s35
      %p41 = scmp.ge.s32.totalorder %s40, 1
      %s42 = scalar_select %p41, 0, %s40
      %s43 = sadd.s32 1, %s34
      %s44 = scalar_select %p41, %s43, %s34
      %p45 = scmp.ge.s32.totalorder %s44, 2
      %s46 = scalar_select %p45, 0, %s44
      %s47 = ssub.s32 %s34, %s46
      %s48 = ssub.s32 %s35, %s42
      %s49 = sor.u32 %s47, %s48
      %p50 = scmp.eq.s32.totalorder %s49, 0
      %s52 = sadd.s32 %s51, 1
      %s53 = scalar_select %p50, %s51, %s52
      %p56 = pneg %p50
      %p57 = scmp.eq.s32.totalorder %s27, 1
      %p58 = por %p56, %p57
      %p59 = scmp.ne.s32.totalorder %s51, %s54
      %p60 = scmp.eq.s32.totalorder %s27, 0
      %p61 = por %p59, %p60
      %p62 = scmp.ne.s32.totalorder %s51, %s54
      %p63 = scmp.eq.s32.totalorder %s32, 1
      %p64 = por %p62, %p63
      %p65 = scmp.ne.s32.totalorder %s54, %s55
      %p66 = scmp.eq.s32.totalorder %s32, 0
      %p67 = por %p65, %p66
      %p68 = scmp.ne.s32.totalorder %s54, %s55
      %p69 = scmp.eq.s32.totalorder %s33, 1
      %p70 = por %p68, %p69
      %p72 = scmp.ne.s32.totalorder %s55, %s71
      %p73 = scmp.eq.s32.totalorder %s33, 0
      %p74 = por %p72, %p73
      %s75 = ssub.s32 %s34, %s46
      %p76 = scmp.eq.s32.totalorder %s75, 0
      %s78 = sadd.s32 %s77, 1
      %s79 = scalar_select %p76, %s77, %s78
      %p82 = pneg %p76
      %p83 = scmp.eq.s32.totalorder %s27, 1
      %p84 = por %p82, %p83
      %p85 = scmp.ne.s32.totalorder %s77, %s80
      %p86 = scmp.eq.s32.totalorder %s27, 0
      %p87 = por %p85, %p86
      %p88 = scmp.ne.s32.totalorder %s77, %s80
      %p89 = scmp.eq.s32.totalorder %s32, 1
      %p90 = por %p88, %p89
      %p91 = scmp.ne.s32.totalorder %s80, %s81
      %p92 = scmp.eq.s32.totalorder %s32, 0
      %p93 = por %p91, %p92
      %p94 = scmp.ne.s32.totalorder %s80, %s81
      %p95 = scmp.eq.s32.totalorder %s33, 1
      %p96 = por %p94, %p95
      %p98 = scmp.ne.s32.totalorder %s81, %s97
      %p99 = scmp.eq.s32.totalorder %s33, 0
      %p100 = por %p98, %p99
      %s102 = sadd.s32 %s101, 1
      %p105 = scmp.eq.s32.totalorder %s27, 1
      %p106 = scmp.ne.s32.totalorder %s101, %s103
      %p107 = scmp.eq.s32.totalorder %s27, 0
      %p108 = por %p106, %p107
      %p109 = scmp.ne.s32.totalorder %s101, %s103
      %p110 = scmp.eq.s32.totalorder %s32, 1
      %p111 = por %p109, %p110
      %p112 = scmp.ne.s32.totalorder %s103, %s104
      %p113 = scmp.eq.s32.totalorder %s32, 0
      %p114 = por %p112, %p113
      %p115 = scmp.ne.s32.totalorder %s103, %s104
      %p116 = scmp.eq.s32.totalorder %s33, 1
      %p117 = por %p115, %p116
      %p119 = scmp.ne.s32.totalorder %s104, %s118
      %p120 = scmp.eq.s32.totalorder %s33, 0
      %p121 = por %p119, %p120
      %s123 = sadd.s32 %s122, 1
      %p126 = scmp.eq.s32.totalorder %s27, 1
      %p127 = scmp.ne.s32.totalorder %s122, %s124
      %p128 = scmp.eq.s32.totalorder %s27, 0
      %p129 = por %p127, %p128
      %p130 = scmp.ne.s32.totalorder %s122, %s124
      %p131 = scmp.eq.s32.totalorder %s32, 1
      %p132 = por %p130, %p131
      %p133 = scmp.ne.s32.totalorder %s124, %s125
      %p134 = scmp.eq.s32.totalorder %s32, 0
      %p135 = por %p133, %p134
      %p136 = scmp.ne.s32.totalorder %s124, %s125
      %p137 = scmp.eq.s32.totalorder %s33, 1
      %p138 = por %p136, %p137
      %p140 = scmp.ne.s32.totalorder %s125, %s139
      %p141 = scmp.eq.s32.totalorder %s33, 0
      %p142 = por %p140, %p141
      %s144 = sadd.s32 %s143, 1
      %p147 = scmp.eq.s32.totalorder %s27, 1
      %p148 = scmp.ne.s32.totalorder %s143, %s145
      %p149 = scmp.eq.s32.totalorder %s27, 0
      %p150 = por %p148, %p149
      %p151 = scmp.ne.s32.totalorder %s143, %s145
      %p152 = scmp.eq.s32.totalorder %s32, 1
      %p153 = por %p151, %p152
      %p154 = scmp.ne.s32.totalorder %s145, %s146
      %p155 = scmp.eq.s32.totalorder %s32, 0
      %p156 = por %p154, %p155
      %p157 = scmp.ne.s32.totalorder %s145, %s146
      %p158 = scmp.eq.s32.totalorder %s33, 1
      %p159 = por %p157, %p158
      %p161 = scmp.ne.s32.totalorder %s146, %s160
      %p162 = scmp.eq.s32.totalorder %s33, 0
      %p163 = por %p161, %p162
      %s165 = sadd.s32 %s164, 1
      %p168 = scmp.eq.s32.totalorder %s27, 1
      %p169 = scmp.ne.s32.totalorder %s164, %s166
      %p170 = scmp.eq.s32.totalorder %s27, 0
      %p171 = por %p169, %p170
      %p172 = scmp.ne.s32.totalorder %s164, %s166
      %p173 = scmp.eq.s32.totalorder %s32, 1
      %p174 = por %p172, %p173
      %p175 = scmp.ne.s32.totalorder %s166, %s167
      %p176 = scmp.eq.s32.totalorder %s32, 0
      %p177 = por %p175, %p176
      %p178 = scmp.ne.s32.totalorder %s166, %s167
      %p179 = scmp.eq.s32.totalorder %s33, 1
      %p180 = por %p178, %p179
      %p182 = scmp.ne.s32.totalorder %s167, %s181
      %p183 = scmp.eq.s32.totalorder %s33, 0
      %p184 = por %p182, %p183
      %s186 = sadd.s32 %s185, 1
      %p189 = scmp.eq.s32.totalorder %s27, 1
      %p190 = scmp.ne.s32.totalorder %s185, %s187
      %p191 = scmp.eq.s32.totalorder %s27, 0
      %p192 = por %p190, %p191
      %p193 = scmp.ne.s32.totalorder %s185, %s187
      %p194 = scmp.eq.s32.totalorder %s32, 1
      %p195 = por %p193, %p194
      %p196 = scmp.ne.s32.totalorder %s187, %s188
      %p197 = scmp.eq.s32.totalorder %s32, 0
      %p198 = por %p196, %p197
      %p199 = scmp.ne.s32.totalorder %s187, %s188
      %p200 = scmp.eq.s32.totalorder %s33, 1
      %p201 = por %p199, %p200
      %p203 = scmp.ne.s32.totalorder %s188, %s202
      %p204 = scmp.eq.s32.totalorder %s33, 0
      %p205 = por %p203, %p204
      %s207 = sadd.s32 %s206, 1
      %p210 = scmp.eq.s32.totalorder %s27, 1
      %p211 = scmp.ne.s32.totalorder %s206, %s208
      %p212 = scmp.eq.s32.totalorder %s27, 0
      %p213 = por %p211, %p212
      %p214 = scmp.ne.s32.totalorder %s206, %s208
      %p215 = scmp.eq.s32.totalorder %s32, 1
      %p216 = por %p214, %p215
      %p217 = scmp.ne.s32.totalorder %s208, %s209
      %p218 = scmp.eq.s32.totalorder %s32, 0
      %p219 = por %p217, %p218
      %p220 = scmp.ne.s32.totalorder %s208, %s209
      %p221 = scmp.eq.s32.totalorder %s33, 1
      %p222 = por %p220, %p221
      %p224 = scmp.ne.s32.totalorder %s209, %s223
      %p225 = scmp.eq.s32.totalorder %s33, 0
      %p226 = por %p224, %p225
      %s228 = sadd.s32 %s227, 1
      %p231 = scmp.eq.s32.totalorder %s27, 1
      %p232 = scmp.ne.s32.totalorder %s227, %s229
      %p233 = scmp.eq.s32.totalorder %s27, 0
      %p234 = por %p232, %p233
      %p235 = scmp.ne.s32.totalorder %s227, %s229
      %p236 = scmp.eq.s32.totalorder %s32, 1
      %p237 = por %p235, %p236
      %p238 = scmp.ne.s32.totalorder %s229, %s230
      %p239 = scmp.eq.s32.totalorder %s32, 0
      %p240 = por %p238, %p239
      %p241 = scmp.ne.s32.totalorder %s229, %s230
      %p242 = scmp.eq.s32.totalorder %s33, 1
      %p243 = por %p241, %p242
      %p245 = scmp.ne.s32.totalorder %s230, %s244
      %p246 = scmp.eq.s32.totalorder %s33, 0
      %p247 = por %p245, %p246
      %s249 = sadd.s32 %s248, 1
      %p252 = scmp.eq.s32.totalorder %s27, 1
      %p253 = scmp.ne.s32.totalorder %s248, %s250
      %p254 = scmp.eq.s32.totalorder %s27, 0
      %p255 = por %p253, %p254
      %p256 = scmp.ne.s32.totalorder %s248, %s250
      %p257 = scmp.eq.s32.totalorder %s32, 1
      %p258 = por %p256, %p257
      %p259 = scmp.ne.s32.totalorder %s250, %s251
      %p260 = scmp.eq.s32.totalorder %s32, 0
      %p261 = por %p259, %p260
      %p262 = scmp.ne.s32.totalorder %s250, %s251
      %p263 = scmp.eq.s32.totalorder %s33, 1
      %p264 = por %p262, %p263
      %p266 = scmp.ne.s32.totalorder %s251, %s265
      %p267 = scmp.eq.s32.totalorder %s33, 0
      %p268 = por %p266, %p267
      %s270 = sadd.s32 %s269, 1
      %p273 = scmp.eq.s32.totalorder %s27, 1
      %p274 = scmp.ne.s32.totalorder %s269, %s271
      %p275 = scmp.eq.s32.totalorder %s27, 0
      %p276 = por %p274, %p275
      %p277 = scmp.ne.s32.totalorder %s269, %s271
      %p278 = scmp.eq.s32.totalorder %s32, 1
      %p279 = por %p277, %p278
      %p280 = scmp.ne.s32.totalorder %s271, %s272
      %p281 = scmp.eq.s32.totalorder %s32, 0
      %p282 = por %p280, %p281
      %p283 = scmp.ne.s32.totalorder %s271, %s272
      %p284 = scmp.eq.s32.totalorder %s33, 1
      %p285 = por %p283, %p284
      %p287 = scmp.ne.s32.totalorder %s272, %s286
      %p288 = scmp.eq.s32.totalorder %s33, 0
      %p289 = por %p287, %p288
      %s291 = sadd.s32 %s290, 1
      %p294 = scmp.eq.s32.totalorder %s27, 1
      %p295 = scmp.ne.s32.totalorder %s290, %s292
      %p296 = scmp.eq.s32.totalorder %s27, 0
      %p297 = por %p295, %p296
      %p298 = scmp.ne.s32.totalorder %s290, %s292
      %p299 = scmp.eq.s32.totalorder %s32, 1
      %p300 = por %p298, %p299
      %p301 = scmp.ne.s32.totalorder %s292, %s293
      %p302 = scmp.eq.s32.totalorder %s32, 0
      %p303 = por %p301, %p302
      %p304 = scmp.ne.s32.totalorder %s292, %s293
      %p305 = scmp.eq.s32.totalorder %s33, 1
      %p306 = por %p304, %p305
      %p308 = scmp.ne.s32.totalorder %s293, %s307
      %p309 = scmp.eq.s32.totalorder %s33, 0
      %p310 = por %p308, %p309
      %s312 = sadd.s32 %s311, 1
      %p315 = scmp.eq.s32.totalorder %s27, 1
      %p316 = scmp.ne.s32.totalorder %s311, %s313
      %p317 = scmp.eq.s32.totalorder %s27, 0
      %p318 = por %p316, %p317
      %p319 = scmp.ne.s32.totalorder %s311, %s313
      %p320 = scmp.eq.s32.totalorder %s32, 1
      %p321 = por %p319, %p320
      %p322 = scmp.ne.s32.totalorder %s313, %s314
      %p323 = scmp.eq.s32.totalorder %s32, 0
      %p324 = por %p322, %p323
      %p325 = scmp.ne.s32.totalorder %s313, %s314
      %p326 = scmp.eq.s32.totalorder %s33, 1
      %p327 = por %p325, %p326
      %p329 = scmp.ne.s32.totalorder %s314, %s328
      %p330 = scmp.eq.s32.totalorder %s33, 0
      %p331 = por %p329, %p330
      %s333 = sadd.s32 %s332, 1
      %p336 = scmp.eq.s32.totalorder %s27, 1
      %p337 = scmp.ne.s32.totalorder %s332, %s334
      %p338 = scmp.eq.s32.totalorder %s27, 0
      %p339 = por %p337, %p338
      %p340 = scmp.ne.s32.totalorder %s332, %s334
      %p341 = scmp.eq.s32.totalorder %s32, 1
      %p342 = por %p340, %p341
      %p343 = scmp.ne.s32.totalorder %s334, %s335
      %p344 = scmp.eq.s32.totalorder %s32, 0
      %p345 = por %p343, %p344
      %p346 = scmp.ne.s32.totalorder %s334, %s335
      %p347 = scmp.eq.s32.totalorder %s33, 1
      %p348 = por %p346, %p347
      %p350 = scmp.ne.s32.totalorder %s335, %s349
      %p351 = scmp.eq.s32.totalorder %s33, 0
      %p352 = por %p350, %p351
      %s354 = sadd.s32 %s353, 1
      %p357 = scmp.eq.s32.totalorder %s27, 1
      %p358 = scmp.ne.s32.totalorder %s353, %s355
      %p359 = scmp.eq.s32.totalorder %s27, 0
      %p360 = por %p358, %p359
      %p361 = scmp.ne.s32.totalorder %s353, %s355
      %p362 = scmp.eq.s32.totalorder %s32, 1
      %p363 = por %p361, %p362
      %p364 = scmp.ne.s32.totalorder %s355, %s356
      %p365 = scmp.eq.s32.totalorder %s32, 0
      %p366 = por %p364, %p365
      %p367 = scmp.ne.s32.totalorder %s355, %s356
      %p368 = scmp.eq.s32.totalorder %s33, 1
      %p369 = por %p367, %p368
      %p371 = scmp.ne.s32.totalorder %s356, %s370
      %p372 = scmp.eq.s32.totalorder %s33, 0
      %p373 = por %p371, %p372
      %s375 = sadd.s32 %s374, 1
      %p378 = scmp.eq.s32.totalorder %s27, 1
      %p379 = scmp.ne.s32.totalorder %s374, %s376
      %p380 = scmp.eq.s32.totalorder %s27, 0
      %p381 = por %p379, %p380
      %p382 = scmp.ne.s32.totalorder %s374, %s376
      %p383 = scmp.eq.s32.totalorder %s32, 1
      %p384 = por %p382, %p383
      %p385 = scmp.ne.s32.totalorder %s376, %s377
      %p386 = scmp.eq.s32.totalorder %s32, 0
      %p387 = por %p385, %p386
      %p388 = scmp.ne.s32.totalorder %s376, %s377
      %p389 = scmp.eq.s32.totalorder %s33, 1
      %p390 = por %p388, %p389
      %p392 = scmp.ne.s32.totalorder %s377, %s391
      %p393 = scmp.eq.s32.totalorder %s33, 0
      %p394 = por %p392, %p393
      %s396 = sadd.s32 %s395, 1
      %p399 = scmp.eq.s32.totalorder %s27, 1
      %p400 = scmp.ne.s32.totalorder %s395, %s397
      %p401 = scmp.eq.s32.totalorder %s27, 0
      %p402 = por %p400, %p401
      %p403 = scmp.ne.s32.totalorder %s395, %s397
      %p404 = scmp.eq.s32.totalorder %s32, 1
      %p405 = por %p403, %p404
      %p406 = scmp.ne.s32.totalorder %s397, %s398
      %p407 = scmp.eq.s32.totalorder %s32, 0
      %p408 = por %p406, %p407
      %p409 = scmp.ne.s32.totalorder %s397, %s398
      %p410 = scmp.eq.s32.totalorder %s33, 1
      %p411 = por %p409, %p410
      %p413 = scmp.ne.s32.totalorder %s398, %s412
      %p414 = scmp.eq.s32.totalorder %s33, 0
      %p415 = por %p413, %p414
      %s417 = sadd.s32 %s416, 1
      %p420 = scmp.eq.s32.totalorder %s27, 1
      %p421 = scmp.ne.s32.totalorder %s416, %s418
      %p422 = scmp.eq.s32.totalorder %s27, 0
      %p423 = por %p421, %p422
      %p424 = scmp.ne.s32.totalorder %s416, %s418
      %p425 = scmp.eq.s32.totalorder %s32, 1
      %p426 = por %p424, %p425
      %p427 = scmp.ne.s32.totalorder %s418, %s419
      %p428 = scmp.eq.s32.totalorder %s32, 0
      %p429 = por %p427, %p428
      %p430 = scmp.ne.s32.totalorder %s418, %s419
      %p431 = scmp.eq.s32.totalorder %s33, 1
      %p432 = por %p430, %p431
      %p434 = scmp.ne.s32.totalorder %s419, %s433
      %p435 = scmp.eq.s32.totalorder %s33, 0
      %p436 = por %p434, %p435
      %s437 = ssub.s32 %s34, %s46
      %s438 = ssub.s32 %s35, %s42
      %s439 = sor.u32 %s437, %s438
      %p440 = scmp.eq.s32.totalorder %s439, 0
      %s442 = sadd.s32 %s441, 1
      %s443 = scalar_select %p440, %s441, %s442
      %p446 = pneg %p440
      %p447 = scmp.eq.s32.totalorder %s27, 1
      %p448 = por %p446, %p447
      %p449 = scmp.ne.s32.totalorder %s441, %s444
      %p450 = scmp.eq.s32.totalorder %s27, 0
      %p451 = por %p449, %p450
      %p452 = scmp.ne.s32.totalorder %s441, %s444
      %p453 = scmp.eq.s32.totalorder %s32, 1
      %p454 = por %p452, %p453
      %p455 = scmp.ne.s32.totalorder %s444, %s445
      %p456 = scmp.eq.s32.totalorder %s32, 0
      %p457 = por %p455, %p456
      %p458 = scmp.ne.s32.totalorder %s444, %s445
      %p459 = scmp.eq.s32.totalorder %s33, 1
      %p460 = por %p458, %p459
      %p462 = scmp.ne.s32.totalorder %s445, %s461
      %p463 = scmp.eq.s32.totalorder %s33, 0
      %p464 = por %p462, %p463
      %p465 = scmp.le.s32.totalorder 1, %s27
      %p466 = scmp.lt.s32.totalorder %s27, 3
      %p467 = pnand %p465, %p466
      %p468 = pneg %p467
      // Predicated region
      $region9: #{tpu_custom_call.1} parent=5 // pred_check
        _
      $region10: #{tpu_custom_call.1} parent=5 // pred_check_branch
        %470 = sbr.rel (%p467) target = $region12
      $region11: #{tpu_custom_call.1} parent=5 // pred_region
        %s471 = ssub.s32 %s27, 1
        // Predicated region
        $region13: #{tpu_custom_call.1} parent=11 // pred_check
          %p472 = pneg %p114
        $region14: #{tpu_custom_call.1} parent=11 // pred_check_branch
          %474 = sbr.rel (%p472) target = $region16
        $region15: #{tpu_custom_call.1} parent=11 // pred_region
          _
        $region16: #{tpu_custom_call.1} parent=11 // pred_fallthru
          _
        // Predicated region
        $region17: #{tpu_custom_call.1} parent=11 // pred_check
          %p475 = pneg %p135
        $region18: #{tpu_custom_call.1} parent=11 // pred_check_branch
          %477 = sbr.rel (%p475) target = $region20
        $region19: #{tpu_custom_call.1} parent=11 // pred_region
          _
        $region20: #{tpu_custom_call.1} parent=11 // pred_fallthru
          _
        // Predicated region
        $region21: #{tpu_custom_call.1} parent=11 // pred_check
          %p478 = pneg %p156
        $region22: #{tpu_custom_call.1} parent=11 // pred_check_branch
          %480 = sbr.rel (%p478) target = $region24
        $region23: #{tpu_custom_call.1} parent=11 // pred_region
          _
        $region24: #{tpu_custom_call.1} parent=11 // pred_fallthru
          _
        // Predicated region
        $region25: #{tpu_custom_call.1} parent=11 // pred_check
          %p481 = pneg %p177
        $region26: #{tpu_custom_call.1} parent=11 // pred_check_branch
          %483 = sbr.rel (%p481) target = $region28
        $region27: #{tpu_custom_call.1} parent=11 // pred_region
          _
        $region28: #{tpu_custom_call.1} parent=11 // pred_fallthru
          _
        // Predicated region
        $region29: #{tpu_custom_call.1} parent=11 // pred_check
          %p484 = pneg %p198
        $region30: #{tpu_custom_call.1} parent=11 // pred_check_branch
          %486 = sbr.rel (%p484) target = $region32
        $region31: #{tpu_custom_call.1} parent=11 // pred_region
          _
        $region32: #{tpu_custom_call.1} parent=11 // pred_fallthru
          _
        // Predicated region
        $region33: #{tpu_custom_call.1} parent=11 // pred_check
          %p487 = pneg %p219
        $region34: #{tpu_custom_call.1} parent=11 // pred_check_branch
          %489 = sbr.rel (%p487) target = $region36
        $region35: #{tpu_custom_call.1} parent=11 // pred_region
          _
        $region36: #{tpu_custom_call.1} parent=11 // pred_fallthru
          _
        // Predicated region
        $region37: #{tpu_custom_call.1} parent=11 // pred_check
          %p490 = pneg %p240
        $region38: #{tpu_custom_call.1} parent=11 // pred_check_branch
          %492 = sbr.rel (%p490) target = $region40
        $region39: #{tpu_custom_call.1} parent=11 // pred_region
          _
        $region40: #{tpu_custom_call.1} parent=11 // pred_fallthru
          _
        // Predicated region
        $region41: #{tpu_custom_call.1} parent=11 // pred_check
          %p493 = pneg %p261
        $region42: #{tpu_custom_call.1} parent=11 // pred_check_branch
          %495 = sbr.rel (%p493) target = $region44
        $region43: #{tpu_custom_call.1} parent=11 // pred_region
          _
        $region44: #{tpu_custom_call.1} parent=11 // pred_fallthru
          _
        // Predicated region
        $region45: #{tpu_custom_call.1} parent=11 // pred_check
          %p496 = pneg %p282
        $region46: #{tpu_custom_call.1} parent=11 // pred_check_branch
          %498 = sbr.rel (%p496) target = $region48
        $region47: #{tpu_custom_call.1} parent=11 // pred_region
          _
        $region48: #{tpu_custom_call.1} parent=11 // pred_fallthru
          _
        // Predicated region
        $region49: #{tpu_custom_call.1} parent=11 // pred_check
          %p499 = pneg %p303
        $region50: #{tpu_custom_call.1} parent=11 // pred_check_branch
          %501 = sbr.rel (%p499) target = $region52
        $region51: #{tpu_custom_call.1} parent=11 // pred_region
          _
        $region52: #{tpu_custom_call.1} parent=11 // pred_fallthru
          _
        // Predicated region
        $region53: #{tpu_custom_call.1} parent=11 // pred_check
          %p502 = pneg %p324
        $region54: #{tpu_custom_call.1} parent=11 // pred_check_branch
          %504 = sbr.rel (%p502) target = $region56
        $region55: #{tpu_custom_call.1} parent=11 // pred_region
          _
        $region56: #{tpu_custom_call.1} parent=11 // pred_fallthru
          _
        // Predicated region
        $region57: #{tpu_custom_call.1} parent=11 // pred_check
          %p505 = pneg %p345
        $region58: #{tpu_custom_call.1} parent=11 // pred_check_branch
          %507 = sbr.rel (%p505) target = $region60
        $region59: #{tpu_custom_call.1} parent=11 // pred_region
          _
        $region60: #{tpu_custom_call.1} parent=11 // pred_fallthru
          _
        // Predicated region
        $region61: #{tpu_custom_call.1} parent=11 // pred_check
          %p508 = pneg %p366
        $region62: #{tpu_custom_call.1} parent=11 // pred_check_branch
          %510 = sbr.rel (%p508) target = $region64
        $region63: #{tpu_custom_call.1} parent=11 // pred_region
          _
        $region64: #{tpu_custom_call.1} parent=11 // pred_fallthru
          _
        // Predicated region
        $region65: #{tpu_custom_call.1} parent=11 // pred_check
          %p511 = pneg %p387
        $region66: #{tpu_custom_call.1} parent=11 // pred_check_branch
          %513 = sbr.rel (%p511) target = $region68
        $region67: #{tpu_custom_call.1} parent=11 // pred_region
          _
        $region68: #{tpu_custom_call.1} parent=11 // pred_fallthru
          _
        // Predicated region
        $region69: #{tpu_custom_call.1} parent=11 // pred_check
          %p514 = pneg %p408
        $region70: #{tpu_custom_call.1} parent=11 // pred_check_branch
          %516 = sbr.rel (%p514) target = $region72
        $region71: #{tpu_custom_call.1} parent=11 // pred_region
          _
        $region72: #{tpu_custom_call.1} parent=11 // pred_fallthru
          _
        // Predicated region
        $region73: #{tpu_custom_call.1} parent=11 // pred_check
          %p517 = pneg %p429
        $region74: #{tpu_custom_call.1} parent=11 // pred_check_branch
          %519 = sbr.rel (%p517) target = $region76
        $region75: #{tpu_custom_call.1} parent=11 // pred_region
          _
        $region76: #{tpu_custom_call.1} parent=11 // pred_fallthru
          _
      $region12: #{tpu_custom_call.1} parent=5 // pred_fallthru
        _
      %p520 = scmp.lt.s32.totalorder %s27, 2
      // Predicated region
      $region77: #{tpu_custom_call.1} parent=5 // pred_check
        %p521 = pneg %p520
      $region78: #{tpu_custom_call.1} parent=5 // pred_check_branch
        %523 = sbr.rel (%p521) target = $region80
      $region79: #{tpu_custom_call.1} parent=5 // pred_region
        // Predicated region
        $region81: #{tpu_custom_call.1} parent=79 // pred_check
          %p524 = pneg %p61
        $region82: #{tpu_custom_call.1} parent=79 // pred_check_branch
          %526 = sbr.rel (%p524) target = $region84
        $region83: #{tpu_custom_call.1} parent=79 // pred_region
          %p527 = scmp.lt.s32.totalorder %s34, 1
          %s528 = scalar_select %p527, %s34, 1
          %p529 = scmp.lt.s32.totalorder %s35, 0
          %s530 = scalar_select %p529, %s35, 0
          %s531 = sadd.s32 %s530, %s528
          %s532 = smul.addr %s531, 8
          %s533 = scalar_lea.vmem %s0, %s532
        $region84: #{tpu_custom_call.1} parent=79 // pred_fallthru
          _
        // Predicated region
        $region85: #{tpu_custom_call.1} parent=79 // pred_check
          %p534 = pneg %p87
        $region86: #{tpu_custom_call.1} parent=79 // pred_check_branch
          %536 = sbr.rel (%p534) target = $region88
        $region87: #{tpu_custom_call.1} parent=79 // pred_region
          %p537 = scmp.lt.s32.totalorder %s34, 1
          %s538 = scalar_select %p537, %s34, 1
          %s539 = scalar_lea.vmem %s1, %s538
        $region88: #{tpu_custom_call.1} parent=79 // pred_fallthru
          _
      $region80: #{tpu_custom_call.1} parent=5 // pred_fallthru
        _
      %p540 = scmp.le.s32.totalorder 1, %s27
      %p541 = scmp.lt.s32.totalorder %s27, 3
      %p542 = pnand %p540, %p541
      %p543 = pneg %p542
      // Predicated region
      $region89: #{tpu_custom_call.1} parent=5 // pred_check
        _
      $region90: #{tpu_custom_call.1} parent=5 // pred_check_branch
        %545 = sbr.rel (%p542) target = $region92
      $region91: #{tpu_custom_call.1} parent=5 // pred_region
        %s546 = ssub.s32 %s27, 1
        %p547 = scmp.lt.s32.totalorder %s36, 1
        %s548 = scalar_select %p547, %s36, 1
        %p549 = scmp.lt.s32.totalorder %s37, 0
        %s550 = scalar_select %p549, %s37, 0
        %s551 = sadd.s32 %s550, %s548
        %s552 = smul.addr %s551, 8
        %s553 = scalar_lea.vmem %s0, %s552
        %p554 = pneg %p67
        %p555 = pneg %p64
        %p556 = scmp.lt.s32.totalorder %s36, 1
        %s557 = scalar_select %p556, %s36, 1
        %s558 = scalar_lea.vmem %s1, %s557
        %p559 = pneg %p93
        %p560 = pneg %p90
        %p561 = pneg %p114
        %p562 = pneg %p111
        %p563 = pneg %p135
        %p564 = pneg %p132
        %p565 = pneg %p156
        %p566 = pneg %p153
        %p567 = pneg %p177
        %p568 = pneg %p174
        %p569 = pneg %p198
        %p570 = pneg %p195
        %p571 = pneg %p219
        %p572 = pneg %p216
        %p573 = pneg %p240
        %p574 = pneg %p237
        %p575 = pneg %p261
        %p576 = pneg %p258
        %p577 = pneg %p282
        %p578 = pneg %p279
        %p579 = pneg %p303
        %p580 = pneg %p300
        %p581 = pneg %p324
        %p582 = pneg %p321
        %p583 = pneg %p345
        %p584 = pneg %p342
        %p585 = pneg %p366
        %p586 = pneg %p363
        %p587 = pneg %p387
        %p588 = pneg %p384
        %p589 = pneg %p408
        %p590 = pneg %p405
        %p591 = pneg %p429
        %p592 = pneg %p426
        %p593 = pneg %p457
        %p594 = pneg %p454
        %s595 = sand.u32 %s444, 1
        %s596 = scalar_lea.sflag [#allocation3], %s595
        %s597 = sand.u32 %s444, 1
        %s598 = smul.addr %s597, 8
        %s599 = scalar_lea.vmem [#allocation2], %s598
        %p600 = scmp.lt.s32.totalorder %s36, 1
        %s601 = scalar_select %p600, %s36, 1
        %p602 = scmp.lt.s32.totalorder %s37, 0
        %s603 = scalar_select %p602, %s37, 0
        %s604 = sadd.s32 %s603, %s601
        %s605 = smul.addr %s604, 8
        %s606 = scalar_lea.vmem %s0, %s605
        %p607 = scmp.lt.s32.totalorder %s36, 1
        %s608 = scalar_select %p607, %s36, 1
        %s609 = scalar_lea.vmem %s1, %s608
        %v611 = vld [vmem:[%s606] sm:$0xff]
        %v612 = vld [vmem:[%s14] sm:$0x1]
        %v613 = vld [vmem:[%s15] sm:$0x1]
        %vm614 = vcmask 261120
        %v615 = vsel %vm614, %v611, 0.0
        %616 = vadd.xlane.f32.xlu0 %v615
        %v617 = vpop.xlane.xlu0 %616
        %v618 = vrcp.pop 32.0
        %v619 = vmul.f32 %v617, %v618
        %v620 = vsub.f32 %v611, %v619
        %v621 = vmul.f32 %v620, %v620
        %v622 = vsel %vm614, %v621, 0.0
        %623 = vadd.xlane.f32.xlu0 %v622
        %v624 = vpop.xlane.xlu0 %623
        %v625 = vmul.f32 %v624, %v618
        %v626 = vadd.f32 %v625, 1e-05
        %v627 = vrsqrt.pop %v626
        %v628 = vmul.f32 %v620, %v627
        %v630 = vlaneseq
        %v631 = vshrl.u32 %v630, 7
        %v632 = vsub.s32 0, %v631
        %v633 = vrot.slane %v612, %v632
        %v635 = vmul.f32 %v628, %v633
        %v637 = vlaneseq
        %v638 = vshrl.u32 %v637, 7
        %v639 = vsub.s32 0, %v638
        %v640 = vrot.slane %v613, %v639
        %v642 = vadd.f32 %v635, %v640
        %v643 = vpack.c.bf16 %v642, %v642
        %v644 = vld [vmem:[%s2] sm:$0xf]
        %v645 = vld [vmem:[%s2 + $0x4] sm:$0xf]
        %v646 = vld [vmem:[%s2 + $0x8] sm:$0xf]
        %v647 = vld [vmem:[%s2 + $0xc] sm:$0xf]
        %v648 = vld [vmem:[%s2 + $0x10] sm:$0xf]
        %v649 = vld [vmem:[%s2 + $0x14] sm:$0xf]
        %v650 = vld [vmem:[%s2 + $0x18] sm:$0xf]
        %v651 = vld [vmem:[%s2 + $0x1c] sm:$0xf]
        %v652 = vld [vmem:[%s2 + $0x20] sm:$0xf]
        %v653 = vld [vmem:[%s2 + $0x24] sm:$0xf]
        %v654 = vld [vmem:[%s2 + $0x28] sm:$0xf]
        %v655 = vld [vmem:[%s2 + $0x2c] sm:$0xf]
        %v656 = vld [vmem:[%s2 + $0x30] sm:$0xf]
        %v657 = vld [vmem:[%s2 + $0x34] sm:$0xf]
        %v658 = vld [vmem:[%s2 + $0x38] sm:$0xf]
        %v659 = vld [vmem:[%s2 + $0x3c] sm:$0xf]
        %v660 = vld [vmem:[%s3] sm:$0x1]
        %v661 = vld [vmem:[%s3 + $0x1] sm:$0x1]
        %v662 = vld [vmem:[%s3 + $0x2] sm:$0x1]
        %v663 = vld [vmem:[%s3 + $0x3] sm:$0x1]
        %v668 = vlaneseq
        %v669 = vshrl.u32 %v668, 7
        %v670 = vsub.s32 0, %v669
        %v671 = vrot.slane %v660, %v670
        %v672 = vlaneseq
        %v673 = vshrl.u32 %v672, 7
        %v674 = vsub.s32 0, %v673
        %v675 = vrot.slane %v661, %v674
        %v676 = vlaneseq
        %v677 = vshrl.u32 %v676, 7
        %v678 = vsub.s32 0, %v677
        %v679 = vrot.slane %v662, %v678
        %v680 = vlaneseq
        %v681 = vshrl.u32 %v680, 7
        %v682 = vsub.s32 0, %v681
        %v683 = vrot.slane %v663, %v682
        %v692 = vunpack.c.l.b16 %v644
        %v693 = vunpack.c.l.b16 %v645
        %v694 = vunpack.c.l.b16 %v646
        %v695 = vunpack.c.l.b16 %v647
        %v696 = vpack.c.b16 %v693, %v692
        %v697 = vpack.c.b16 %v695, %v694
        %v701 = vsel %vm614, %v643, 0
        %703 = vmatprep.subr.bf16.mxu0 0
        %704 = vmatpush1.bf16.msra.mxu0 0
        %705 = vmatprep.subr.bf16.mxu0 0
        %706 = vmatpush1.bf16.msra.mxu0 0
        %707 = vmatprep.subr.bf16.mxu0 0
        %708 = vmatpush1.bf16.msra.mxu0 0
        %709 = vmatprep.subr.bf16.mxu0 0
        %710 = vmatpush1.bf16.msra.mxu0 0
        %711 = vmatprep.subr.bf16.mxu0 0
        %712 = vmatpush1.bf16.msra.mxu0 0
        %713 = vmatprep.subr.bf16.mxu0 0
        %714 = vmatpush1.bf16.msra.mxu0 0
        %715 = vmatprep.subr.bf16.mxu0 0
        %716 = vmatpush1.bf16.msra.mxu0 %v697
        %717 = vmatprep.subr.bf16.mxu0 0
        %718 = vmatpush1.bf16.msra.mxu0 %v696
        %719 = vmatprep.subr.bf16.mxu0 0
        %720 = vmatpush2.bf16.msra.mxu0 0
        %721 = vmatprep.subr.bf16.mxu0 0
        %722 = vmatpush2.bf16.msra.mxu0 0
        %723 = vmatprep.subr.bf16.mxu0 0
        %724 = vmatpush2.bf16.msra.mxu0 0
        %725 = vmatprep.subr.bf16.mxu0 0
        %726 = vmatpush2.bf16.msra.mxu0 0
        %727 = vmatprep.subr.bf16.mxu0 0
        %728 = vmatpush2.bf16.msra.mxu0 0
        %729 = vmatprep.subr.bf16.mxu0 0
        %730 = vmatpush2.bf16.msra.mxu0 0
        %731 = vmatprep.subr.bf16.mxu0 0
        %732 = vmatpush2.bf16.msra.mxu0 0
        %733 = vmatprep.subr.bf16.mxu0 0
        %734 = vmatpush2.bf16.msra.mxu0 0
        %735 = vmatprep.mubr.bf16.mxu0 0
        %736 = vmatmul.mubr.bf16.gmra.mxu0 %v701
        %v737 = vpop.f32.mrf.mxu0
        %v738 = vadd.f32 %v671, %v737
        %v739 = vpop.f32.mrf.mxu0
        %v740 = vpop.f32.mrf.mxu0
        %v741 = vpop.f32.mrf.mxu0
        %742 = vdwg.mxu0
        %v747 = vunpack.c.l.b16 %v648
        %v748 = vunpack.c.l.b16 %v649
        %v749 = vunpack.c.l.b16 %v650
        %v750 = vunpack.c.l.b16 %v651
        %v751 = vpack.c.b16 %v748, %v747
        %v752 = vpack.c.b16 %v750, %v749
        %755 = vmatprep.subr.bf16.mxu0 0
        %756 = vmatpush1.bf16.msra.mxu0 0
        %757 = vmatprep.subr.bf16.mxu0 0
        %758 = vmatpush1.bf16.msra.mxu0 0
        %759 = vmatprep.subr.bf16.mxu0 0
        %760 = vmatpush1.bf16.msra.mxu0 0
        %761 = vmatprep.subr.bf16.mxu0 0
        %762 = vmatpush1.bf16.msra.mxu0 0
        %763 = vmatprep.subr.bf16.mxu0 0
        %764 = vmatpush1.bf16.msra.mxu0 0
        %765 = vmatprep.subr.bf16.mxu0 0
        %766 = vmatpush1.bf16.msra.mxu0 0
        %767 = vmatprep.subr.bf16.mxu0 0
        %768 = vmatpush1.bf16.msra.mxu0 %v752
        %769 = vmatprep.subr.bf16.mxu0 0
        %770 = vmatpush1.bf16.msra.mxu0 %v751
        %771 = vmatprep.subr.bf16.mxu0 0
        %772 = vmatpush2.bf16.msra.mxu0 0
        %773 = vmatprep.subr.bf16.mxu0 0
        %774 = vmatpush2.bf16.msra.mxu0 0
        %775 = vmatprep.subr.bf16.mxu0 0
        %776 = vmatpush2.bf16.msra.mxu0 0
        %777 = vmatprep.subr.bf16.mxu0 0
        %778 = vmatpush2.bf16.msra.mxu0 0
        %779 = vmatprep.subr.bf16.mxu0 0
        %780 = vmatpush2.bf16.msra.mxu0 0
        %781 = vmatprep.subr.bf16.mxu0 0
        %782 = vmatpush2.bf16.msra.mxu0 0
        %783 = vmatprep.subr.bf16.mxu0 0
        %784 = vmatpush2.bf16.msra.mxu0 0
        %785 = vmatprep.subr.bf16.mxu0 0
        %786 = vmatpush2.bf16.msra.mxu0 0
        %787 = vmatprep.mubr.bf16.mxu0 0
        %788 = vmatmul.mubr.bf16.gmra.mxu0 %v701
        %v789 = vpop.f32.mrf.mxu0
        %v790 = vadd.f32 %v675, %v789
        %v791 = vpop.f32.mrf.mxu0
        %v792 = vpop.f32.mrf.mxu0
        %v793 = vpop.f32.mrf.mxu0
        %794 = vdwg.mxu0
        %v799 = vunpack.c.l.b16 %v652
        %v800 = vunpack.c.l.b16 %v653
        %v801 = vunpack.c.l.b16 %v654
        %v802 = vunpack.c.l.b16 %v655
        %v803 = vpack.c.b16 %v800, %v799
        %v804 = vpack.c.b16 %v802, %v801
        %807 = vmatprep.subr.bf16.mxu0 0
        %808 = vmatpush1.bf16.msra.mxu0 0
        %809 = vmatprep.subr.bf16.mxu0 0
        %810 = vmatpush1.bf16.msra.mxu0 0
        %811 = vmatprep.subr.bf16.mxu0 0
        %812 = vmatpush1.bf16.msra.mxu0 0
        %813 = vmatprep.subr.bf16.mxu0 0
        %814 = vmatpush1.bf16.msra.mxu0 0
        %815 = vmatprep.subr.bf16.mxu0 0
        %816 = vmatpush1.bf16.msra.mxu0 0
        %817 = vmatprep.subr.bf16.mxu0 0
        %818 = vmatpush1.bf16.msra.mxu0 0
        %819 = vmatprep.subr.bf16.mxu0 0
        %820 = vmatpush1.bf16.msra.mxu0 %v804
        %821 = vmatprep.subr.bf16.mxu0 0
        %822 = vmatpush1.bf16.msra.mxu0 %v803
        %823 = vmatprep.subr.bf16.mxu0 0
        %824 = vmatpush2.bf16.msra.mxu0 0
        %825 = vmatprep.subr.bf16.mxu0 0
        %826 = vmatpush2.bf16.msra.mxu0 0
        %827 = vmatprep.subr.bf16.mxu0 0
        %828 = vmatpush2.bf16.msra.mxu0 0
        %829 = vmatprep.subr.bf16.mxu0 0
        %830 = vmatpush2.bf16.msra.mxu0 0
        %831 = vmatprep.subr.bf16.mxu0 0
        %832 = vmatpush2.bf16.msra.mxu0 0
        %833 = vmatprep.subr.bf16.mxu0 0
        %834 = vmatpush2.bf16.msra.mxu0 0
        %835 = vmatprep.subr.bf16.mxu0 0
        %836 = vmatpush2.bf16.msra.mxu0 0
        %837 = vmatprep.subr.bf16.mxu0 0
        %838 = vmatpush2.bf16.msra.mxu0 0
        %839 = vmatprep.mubr.bf16.mxu0 0
        %840 = vmatmul.mubr.bf16.gmra.mxu0 %v701
        %v841 = vpop.f32.mrf.mxu0
        %v842 = vadd.f32 %v679, %v841
        %v843 = vpop.f32.mrf.mxu0
        %v844 = vpop.f32.mrf.mxu0
        %v845 = vpop.f32.mrf.mxu0
        %846 = vdwg.mxu0
        %v851 = vunpack.c.l.b16 %v656
        %v852 = vunpack.c.l.b16 %v657
        %v853 = vunpack.c.l.b16 %v658
        %v854 = vunpack.c.l.b16 %v659
        %v855 = vpack.c.b16 %v852, %v851
        %v856 = vpack.c.b16 %v854, %v853
        %859 = vmatprep.subr.bf16.mxu0 0
        %860 = vmatpush1.bf16.msra.mxu0 0
        %861 = vmatprep.subr.bf16.mxu0 0
        %862 = vmatpush1.bf16.msra.mxu0 0
        %863 = vmatprep.subr.bf16.mxu0 0
        %864 = vmatpush1.bf16.msra.mxu0 0
        %865 = vmatprep.subr.bf16.mxu0 0
        %866 = vmatpush1.bf16.msra.mxu0 0
        %867 = vmatprep.subr.bf16.mxu0 0
        %868 = vmatpush1.bf16.msra.mxu0 0
        %869 = vmatprep.subr.bf16.mxu0 0
        %870 = vmatpush1.bf16.msra.mxu0 0
        %871 = vmatprep.subr.bf16.mxu0 0
        %872 = vmatpush1.bf16.msra.mxu0 %v856
        %873 = vmatprep.subr.bf16.mxu0 0
        %874 = vmatpush1.bf16.msra.mxu0 %v855
        %875 = vmatprep.subr.bf16.mxu0 0
        %876 = vmatpush2.bf16.msra.mxu0 0
        %877 = vmatprep.subr.bf16.mxu0 0
        %878 = vmatpush2.bf16.msra.mxu0 0
        %879 = vmatprep.subr.bf16.mxu0 0
        %880 = vmatpush2.bf16.msra.mxu0 0
        %881 = vmatprep.subr.bf16.mxu0 0
        %882 = vmatpush2.bf16.msra.mxu0 0
        %883 = vmatprep.subr.bf16.mxu0 0
        %884 = vmatpush2.bf16.msra.mxu0 0
        %885 = vmatprep.subr.bf16.mxu0 0
        %886 = vmatpush2.bf16.msra.mxu0 0
        %887 = vmatprep.subr.bf16.mxu0 0
        %888 = vmatpush2.bf16.msra.mxu0 0
        %889 = vmatprep.subr.bf16.mxu0 0
        %890 = vmatpush2.bf16.msra.mxu0 0
        %891 = vmatprep.mubr.bf16.mxu0 0
        %892 = vmatmul.mubr.bf16.gmra.mxu0 %v701
        %v893 = vpop.f32.mrf.mxu0
        %v894 = vadd.f32 %v683, %v893
        %v895 = vpop.f32.mrf.mxu0
        %v896 = vpop.f32.mrf.mxu0
        %v897 = vpop.f32.mrf.mxu0
        %898 = vdwg.mxu0
        %v899 = vld [vmem:[%s4] sm:$0xf]
        %v900 = vld [vmem:[%s4 + $0x4] sm:$0xf]
        %v901 = vld [vmem:[%s4 + $0x8] sm:$0xf]
        %v902 = vld [vmem:[%s4 + $0xc] sm:$0xf]
        %v903 = vld [vmem:[%s4 + $0x10] sm:$0xf]
        %v904 = vld [vmem:[%s4 + $0x14] sm:$0xf]
        %v905 = vld [vmem:[%s4 + $0x18] sm:$0xf]
        %v906 = vld [vmem:[%s4 + $0x1c] sm:$0xf]
        %v907 = vld [vmem:[%s4 + $0x20] sm:$0xf]
        %v908 = vld [vmem:[%s4 + $0x24] sm:$0xf]
        %v909 = vld [vmem:[%s4 + $0x28] sm:$0xf]
        %v910 = vld [vmem:[%s4 + $0x2c] sm:$0xf]
        %v911 = vld [vmem:[%s4 + $0x30] sm:$0xf]
        %v912 = vld [vmem:[%s4 + $0x34] sm:$0xf]
        %v913 = vld [vmem:[%s4 + $0x38] sm:$0xf]
        %v914 = vld [vmem:[%s4 + $0x3c] sm:$0xf]
        %v915 = vld [vmem:[%s5] sm:$0x1]
        %v916 = vld [vmem:[%s5 + $0x1] sm:$0x1]
        %v917 = vld [vmem:[%s5 + $0x2] sm:$0x1]
        %v918 = vld [vmem:[%s5 + $0x3] sm:$0x1]
        %v923 = vlaneseq
        %v924 = vshrl.u32 %v923, 7
        %v925 = vsub.s32 0, %v924
        %v926 = vrot.slane %v915, %v925
        %v927 = vlaneseq
        %v928 = vshrl.u32 %v927, 7
        %v929 = vsub.s32 0, %v928
        %v930 = vrot.slane %v916, %v929
        %v931 = vlaneseq
        %v932 = vshrl.u32 %v931, 7
        %v933 = vsub.s32 0, %v932
        %v934 = vrot.slane %v917, %v933
        %v935 = vlaneseq
        %v936 = vshrl.u32 %v935, 7
        %v937 = vsub.s32 0, %v936
        %v938 = vrot.slane %v918, %v937
        %v947 = vunpack.c.l.b16 %v899
        %v948 = vunpack.c.l.b16 %v900
        %v949 = vunpack.c.l.b16 %v901
        %v950 = vunpack.c.l.b16 %v902
        %v951 = vpack.c.b16 %v948, %v947
        %v952 = vpack.c.b16 %v950, %v949
        %955 = vmatprep.subr.bf16.mxu0 0
        %956 = vmatpush1.bf16.msra.mxu0 0
        %957 = vmatprep.subr.bf16.mxu0 0
        %958 = vmatpush1.bf16.msra.mxu0 0
        %959 = vmatprep.subr.bf16.mxu0 0
        %960 = vmatpush1.bf16.msra.mxu0 0
        %961 = vmatprep.subr.bf16.mxu0 0
        %962 = vmatpush1.bf16.msra.mxu0 0
        %963 = vmatprep.subr.bf16.mxu0 0
        %964 = vmatpush1.bf16.msra.mxu0 0
        %965 = vmatprep.subr.bf16.mxu0 0
        %966 = vmatpush1.bf16.msra.mxu0 0
        %967 = vmatprep.subr.bf16.mxu0 0
        %968 = vmatpush1.bf16.msra.mxu0 %v952
        %969 = vmatprep.subr.bf16.mxu0 0
        %970 = vmatpush1.bf16.msra.mxu0 %v951
        %971 = vmatprep.subr.bf16.mxu0 0
        %972 = vmatpush2.bf16.msra.mxu0 0
        %973 = vmatprep.subr.bf16.mxu0 0
        %974 = vmatpush2.bf16.msra.mxu0 0
        %975 = vmatprep.subr.bf16.mxu0 0
        %976 = vmatpush2.bf16.msra.mxu0 0
        %977 = vmatprep.subr.bf16.mxu0 0
        %978 = vmatpush2.bf16.msra.mxu0 0
        %979 = vmatprep.subr.bf16.mxu0 0
        %980 = vmatpush2.bf16.msra.mxu0 0
        %981 = vmatprep.subr.bf16.mxu0 0
        %982 = vmatpush2.bf16.msra.mxu0 0
        %983 = vmatprep.subr.bf16.mxu0 0
        %984 = vmatpush2.bf16.msra.mxu0 0
        %985 = vmatprep.subr.bf16.mxu0 0
        %986 = vmatpush2.bf16.msra.mxu0 0
        %987 = vmatprep.mubr.bf16.mxu0 0
        %988 = vmatmul.mubr.bf16.gmra.mxu0 %v701
        %v989 = vpop.f32.mrf.mxu0
        %v990 = vadd.f32 %v926, %v989
        %v991 = vpop.f32.mrf.mxu0
        %v992 = vpop.f32.mrf.mxu0
        %v993 = vpop.f32.mrf.mxu0
        %994 = vdwg.mxu0
        %v999 = vunpack.c.l.b16 %v903
        %v1000 = vunpack.c.l.b16 %v904
        %v1001 = vunpack.c.l.b16 %v905
        %v1002 = vunpack.c.l.b16 %v906
        %v1003 = vpack.c.b16 %v1000, %v999
        %v1004 = vpack.c.b16 %v1002, %v1001
        %1007 = vmatprep.subr.bf16.mxu0 0
        %1008 = vmatpush1.bf16.msra.mxu0 0
        %1009 = vmatprep.subr.bf16.mxu0 0
        %1010 = vmatpush1.bf16.msra.mxu0 0
        %1011 = vmatprep.subr.bf16.mxu0 0
        %1012 = vmatpush1.bf16.msra.mxu0 0
        %1013 = vmatprep.subr.bf16.mxu0 0
        %1014 = vmatpush1.bf16.msra.mxu0 0
        %1015 = vmatprep.subr.bf16.mxu0 0
        %1016 = vmatpush1.bf16.msra.mxu0 0
        %1017 = vmatprep.subr.bf16.mxu0 0
        %1018 = vmatpush1.bf16.msra.mxu0 0
        %1019 = vmatprep.subr.bf16.mxu0 0
        %1020 = vmatpush1.bf16.msra.mxu0 %v1004
        %1021 = vmatprep.subr.bf16.mxu0 0
        %1022 = vmatpush1.bf16.msra.mxu0 %v1003
        %1023 = vmatprep.subr.bf16.mxu0 0
        %1024 = vmatpush2.bf16.msra.mxu0 0
        %1025 = vmatprep.subr.bf16.mxu0 0
        %1026 = vmatpush2.bf16.msra.mxu0 0
        %1027 = vmatprep.subr.bf16.mxu0 0
        %1028 = vmatpush2.bf16.msra.mxu0 0
        %1029 = vmatprep.subr.bf16.mxu0 0
        %1030 = vmatpush2.bf16.msra.mxu0 0
        %1031 = vmatprep.subr.bf16.mxu0 0
        %1032 = vmatpush2.bf16.msra.mxu0 0
        %1033 = vmatprep.subr.bf16.mxu0 0
        %1034 = vmatpush2.bf16.msra.mxu0 0
        %1035 = vmatprep.subr.bf16.mxu0 0
        %1036 = vmatpush2.bf16.msra.mxu0 0
        %1037 = vmatprep.subr.bf16.mxu0 0
        %1038 = vmatpush2.bf16.msra.mxu0 0
        %1039 = vmatprep.mubr.bf16.mxu0 0
        %1040 = vmatmul.mubr.bf16.gmra.mxu0 %v701
        %v1041 = vpop.f32.mrf.mxu0
        %v1042 = vadd.f32 %v930, %v1041
        %v1043 = vpop.f32.mrf.mxu0
        %v1044 = vpop.f32.mrf.mxu0
        %v1045 = vpop.f32.mrf.mxu0
        %1046 = vdwg.mxu0
        %v1051 = vunpack.c.l.b16 %v907
        %v1052 = vunpack.c.l.b16 %v908
        %v1053 = vunpack.c.l.b16 %v909
        %v1054 = vunpack.c.l.b16 %v910
        %v1055 = vpack.c.b16 %v1052, %v1051
        %v1056 = vpack.c.b16 %v1054, %v1053
        %1059 = vmatprep.subr.bf16.mxu0 0
        %1060 = vmatpush1.bf16.msra.mxu0 0
        %1061 = vmatprep.subr.bf16.mxu0 0
        %1062 = vmatpush1.bf16.msra.mxu0 0
        %1063 = vmatprep.subr.bf16.mxu0 0
        %1064 = vmatpush1.bf16.msra.mxu0 0
        %1065 = vmatprep.subr.bf16.mxu0 0
        %1066 = vmatpush1.bf16.msra.mxu0 0
        %1067 = vmatprep.subr.bf16.mxu0 0
        %1068 = vmatpush1.bf16.msra.mxu0 0
        %1069 = vmatprep.subr.bf16.mxu0 0
        %1070 = vmatpush1.bf16.msra.mxu0 0
        %1071 = vmatprep.subr.bf16.mxu0 0
        %1072 = vmatpush1.bf16.msra.mxu0 %v1056
        %1073 = vmatprep.subr.bf16.mxu0 0
        %1074 = vmatpush1.bf16.msra.mxu0 %v1055
        %1075 = vmatprep.subr.bf16.mxu0 0
        %1076 = vmatpush2.bf16.msra.mxu0 0
        %1077 = vmatprep.subr.bf16.mxu0 0
        %1078 = vmatpush2.bf16.msra.mxu0 0
        %1079 = vmatprep.subr.bf16.mxu0 0
        %1080 = vmatpush2.bf16.msra.mxu0 0
        %1081 = vmatprep.subr.bf16.mxu0 0
        %1082 = vmatpush2.bf16.msra.mxu0 0
        %1083 = vmatprep.subr.bf16.mxu0 0
        %1084 = vmatpush2.bf16.msra.mxu0 0
        %1085 = vmatprep.subr.bf16.mxu0 0
        %1086 = vmatpush2.bf16.msra.mxu0 0
        %1087 = vmatprep.subr.bf16.mxu0 0
        %1088 = vmatpush2.bf16.msra.mxu0 0
        %1089 = vmatprep.subr.bf16.mxu0 0
        %1090 = vmatpush2.bf16.msra.mxu0 0
        %1091 = vmatprep.mubr.bf16.mxu0 0
        %1092 = vmatmul.mubr.bf16.gmra.mxu0 %v701
        %v1093 = vpop.f32.mrf.mxu0
        %v1094 = vadd.f32 %v934, %v1093
        %v1095 = vpop.f32.mrf.mxu0
        %v1096 = vpop.f32.mrf.mxu0
        %v1097 = vpop.f32.mrf.mxu0
        %1098 = vdwg.mxu0
        %v1103 = vunpack.c.l.b16 %v911
        %v1104 = vunpack.c.l.b16 %v912
        %v1105 = vunpack.c.l.b16 %v913
        %v1106 = vunpack.c.l.b16 %v914
        %v1107 = vpack.c.b16 %v1104, %v1103
        %v1108 = vpack.c.b16 %v1106, %v1105
        %1111 = vmatprep.subr.bf16.mxu0 0
        %1112 = vmatpush1.bf16.msra.mxu0 0
        %1113 = vmatprep.subr.bf16.mxu0 0
        %1114 = vmatpush1.bf16.msra.mxu0 0
        %1115 = vmatprep.subr.bf16.mxu0 0
        %1116 = vmatpush1.bf16.msra.mxu0 0
        %1117 = vmatprep.subr.bf16.mxu0 0
        %1118 = vmatpush1.bf16.msra.mxu0 0
        %1119 = vmatprep.subr.bf16.mxu0 0
        %1120 = vmatpush1.bf16.msra.mxu0 0
        %1121 = vmatprep.subr.bf16.mxu0 0
        %1122 = vmatpush1.bf16.msra.mxu0 0
        %1123 = vmatprep.subr.bf16.mxu0 0
        %1124 = vmatpush1.bf16.msra.mxu0 %v1108
        %1125 = vmatprep.subr.bf16.mxu0 0
        %1126 = vmatpush1.bf16.msra.mxu0 %v1107
        %1127 = vmatprep.subr.bf16.mxu0 0
        %1128 = vmatpush2.bf16.msra.mxu0 0
        %1129 = vmatprep.subr.bf16.mxu0 0
        %1130 = vmatpush2.bf16.msra.mxu0 0
        %1131 = vmatprep.subr.bf16.mxu0 0
        %1132 = vmatpush2.bf16.msra.mxu0 0
        %1133 = vmatprep.subr.bf16.mxu0 0
        %1134 = vmatpush2.bf16.msra.mxu0 0
        %1135 = vmatprep.subr.bf16.mxu0 0
        %1136 = vmatpush2.bf16.msra.mxu0 0
        %1137 = vmatprep.subr.bf16.mxu0 0
        %1138 = vmatpush2.bf16.msra.mxu0 0
        %1139 = vmatprep.subr.bf16.mxu0 0
        %1140 = vmatpush2.bf16.msra.mxu0 0
        %1141 = vmatprep.subr.bf16.mxu0 0
        %1142 = vmatpush2.bf16.msra.mxu0 0
        %1143 = vmatprep.mubr.bf16.mxu0 0
        %1144 = vmatmul.mubr.bf16.gmra.mxu0 %v701
        %v1145 = vpop.f32.mrf.mxu0
        %v1146 = vadd.f32 %v938, %v1145
        %v1147 = vpop.f32.mrf.mxu0
        %v1148 = vpop.f32.mrf.mxu0
        %v1149 = vpop.f32.mrf.mxu0
        %1150 = vdwg.mxu0
        %v1151 = vld [vmem:[%s6] sm:$0xf]
        %v1152 = vld [vmem:[%s6 + $0x4] sm:$0xf]
        %v1153 = vld [vmem:[%s6 + $0x8] sm:$0xf]
        %v1154 = vld [vmem:[%s6 + $0xc] sm:$0xf]
        %v1155 = vld [vmem:[%s6 + $0x10] sm:$0xf]
        %v1156 = vld [vmem:[%s6 + $0x14] sm:$0xf]
        %v1157 = vld [vmem:[%s6 + $0x18] sm:$0xf]
        %v1158 = vld [vmem:[%s6 + $0x1c] sm:$0xf]
        %v1159 = vld [vmem:[%s6 + $0x20] sm:$0xf]
        %v1160 = vld [vmem:[%s6 + $0x24] sm:$0xf]
        %v1161 = vld [vmem:[%s6 + $0x28] sm:$0xf]
        %v1162 = vld [vmem:[%s6 + $0x2c] sm:$0xf]
        %v1163 = vld [vmem:[%s6 + $0x30] sm:$0xf]
        %v1164 = vld [vmem:[%s6 + $0x34] sm:$0xf]
        %v1165 = vld [vmem:[%s6 + $0x38] sm:$0xf]
        %v1166 = vld [vmem:[%s6 + $0x3c] sm:$0xf]
        %v1167 = vld [vmem:[%s7] sm:$0x1]
        %v1168 = vld [vmem:[%s7 + $0x1] sm:$0x1]
        %v1169 = vld [vmem:[%s7 + $0x2] sm:$0x1]
        %v1170 = vld [vmem:[%s7 + $0x3] sm:$0x1]
        %v1175 = vlaneseq
        %v1176 = vshrl.u32 %v1175, 7
        %v1177 = vsub.s32 0, %v1176
        %v1178 = vrot.slane %v1167, %v1177
        %v1179 = vlaneseq
        %v1180 = vshrl.u32 %v1179, 7
        %v1181 = vsub.s32 0, %v1180
        %v1182 = vrot.slane %v1168, %v1181
        %v1183 = vlaneseq
        %v1184 = vshrl.u32 %v1183, 7
        %v1185 = vsub.s32 0, %v1184
        %v1186 = vrot.slane %v1169, %v1185
        %v1187 = vlaneseq
        %v1188 = vshrl.u32 %v1187, 7
        %v1189 = vsub.s32 0, %v1188
        %v1190 = vrot.slane %v1170, %v1189
        %v1199 = vunpack.c.l.b16 %v1151
        %v1200 = vunpack.c.l.b16 %v1152
        %v1201 = vunpack.c.l.b16 %v1153
        %v1202 = vunpack.c.l.b16 %v1154
        %v1203 = vpack.c.b16 %v1200, %v1199
        %v1204 = vpack.c.b16 %v1202, %v1201
        %1207 = vmatprep.subr.bf16.mxu0 0
        %1208 = vmatpush1.bf16.msra.mxu0 0
        %1209 = vmatprep.subr.bf16.mxu0 0
        %1210 = vmatpush1.bf16.msra.mxu0 0
        %1211 = vmatprep.subr.bf16.mxu0 0
        %1212 = vmatpush1.bf16.msra.mxu0 0
        %1213 = vmatprep.subr.bf16.mxu0 0
        %1214 = vmatpush1.bf16.msra.mxu0 0
        %1215 = vmatprep.subr.bf16.mxu0 0
        %1216 = vmatpush1.bf16.msra.mxu0 0
        %1217 = vmatprep.subr.bf16.mxu0 0
        %1218 = vmatpush1.bf16.msra.mxu0 0
        %1219 = vmatprep.subr.bf16.mxu0 0
        %1220 = vmatpush1.bf16.msra.mxu0 %v1204
        %1221 = vmatprep.subr.bf16.mxu0 0
        %1222 = vmatpush1.bf16.msra.mxu0 %v1203
        %1223 = vmatprep.subr.bf16.mxu0 0
        %1224 = vmatpush2.bf16.msra.mxu0 0
        %1225 = vmatprep.subr.bf16.mxu0 0
        %1226 = vmatpush2.bf16.msra.mxu0 0
        %1227 = vmatprep.subr.bf16.mxu0 0
        %1228 = vmatpush2.bf16.msra.mxu0 0
        %1229 = vmatprep.subr.bf16.mxu0 0
        %1230 = vmatpush2.bf16.msra.mxu0 0
        %1231 = vmatprep.subr.bf16.mxu0 0
        %1232 = vmatpush2.bf16.msra.mxu0 0
        %1233 = vmatprep.subr.bf16.mxu0 0
        %1234 = vmatpush2.bf16.msra.mxu0 0
        %1235 = vmatprep.subr.bf16.mxu0 0
        %1236 = vmatpush2.bf16.msra.mxu0 0
        %1237 = vmatprep.subr.bf16.mxu0 0
        %1238 = vmatpush2.bf16.msra.mxu0 0
        %1239 = vmatprep.mubr.bf16.mxu0 0
        %1240 = vmatmul.mubr.bf16.gmra.mxu0 %v701
        %v1241 = vpop.f32.mrf.mxu0
        %v1242 = vadd.f32 %v1178, %v1241
        %v1243 = vpop.f32.mrf.mxu0
        %v1244 = vpop.f32.mrf.mxu0
        %v1245 = vpop.f32.mrf.mxu0
        %1246 = vdwg.mxu0
        %v1251 = vunpack.c.l.b16 %v1155
        %v1252 = vunpack.c.l.b16 %v1156
        %v1253 = vunpack.c.l.b16 %v1157
        %v1254 = vunpack.c.l.b16 %v1158
        %v1255 = vpack.c.b16 %v1252, %v1251
        %v1256 = vpack.c.b16 %v1254, %v1253
        %1259 = vmatprep.subr.bf16.mxu0 0
        %1260 = vmatpush1.bf16.msra.mxu0 0
        %1261 = vmatprep.subr.bf16.mxu0 0
        %1262 = vmatpush1.bf16.msra.mxu0 0
        %1263 = vmatprep.subr.bf16.mxu0 0
        %1264 = vmatpush1.bf16.msra.mxu0 0
        %1265 = vmatprep.subr.bf16.mxu0 0
        %1266 = vmatpush1.bf16.msra.mxu0 0
        %1267 = vmatprep.subr.bf16.mxu0 0
        %1268 = vmatpush1.bf16.msra.mxu0 0
        %1269 = vmatprep.subr.bf16.mxu0 0
        %1270 = vmatpush1.bf16.msra.mxu0 0
        %1271 = vmatprep.subr.bf16.mxu0 0
        %1272 = vmatpush1.bf16.msra.mxu0 %v1256
        %1273 = vmatprep.subr.bf16.mxu0 0
        %1274 = vmatpush1.bf16.msra.mxu0 %v1255
        %1275 = vmatprep.subr.bf16.mxu0 0
        %1276 = vmatpush2.bf16.msra.mxu0 0
        %1277 = vmatprep.subr.bf16.mxu0 0
        %1278 = vmatpush2.bf16.msra.mxu0 0
        %1279 = vmatprep.subr.bf16.mxu0 0
        %1280 = vmatpush2.bf16.msra.mxu0 0
        %1281 = vmatprep.subr.bf16.mxu0 0
        %1282 = vmatpush2.bf16.msra.mxu0 0
        %1283 = vmatprep.subr.bf16.mxu0 0
        %1284 = vmatpush2.bf16.msra.mxu0 0
        %1285 = vmatprep.subr.bf16.mxu0 0
        %1286 = vmatpush2.bf16.msra.mxu0 0
        %1287 = vmatprep.subr.bf16.mxu0 0
        %1288 = vmatpush2.bf16.msra.mxu0 0
        %1289 = vmatprep.subr.bf16.mxu0 0
        %1290 = vmatpush2.bf16.msra.mxu0 0
        %1291 = vmatprep.mubr.bf16.mxu0 0
        %1292 = vmatmul.mubr.bf16.gmra.mxu0 %v701
        %v1293 = vpop.f32.mrf.mxu0
        %v1294 = vadd.f32 %v1182, %v1293
        %v1295 = vpop.f32.mrf.mxu0
        %v1296 = vpop.f32.mrf.mxu0
        %v1297 = vpop.f32.mrf.mxu0
        %1298 = vdwg.mxu0
        %v1303 = vunpack.c.l.b16 %v1159
        %v1304 = vunpack.c.l.b16 %v1160
        %v1305 = vunpack.c.l.b16 %v1161
        %v1306 = vunpack.c.l.b16 %v1162
        %v1307 = vpack.c.b16 %v1304, %v1303
        %v1308 = vpack.c.b16 %v1306, %v1305
        %1311 = vmatprep.subr.bf16.mxu0 0
        %1312 = vmatpush1.bf16.msra.mxu0 0
        %1313 = vmatprep.subr.bf16.mxu0 0
        %1314 = vmatpush1.bf16.msra.mxu0 0
        %1315 = vmatprep.subr.bf16.mxu0 0
        %1316 = vmatpush1.bf16.msra.mxu0 0
        %1317 = vmatprep.subr.bf16.mxu0 0
        %1318 = vmatpush1.bf16.msra.mxu0 0
        %1319 = vmatprep.subr.bf16.mxu0 0
        %1320 = vmatpush1.bf16.msra.mxu0 0
        %1321 = vmatprep.subr.bf16.mxu0 0
        %1322 = vmatpush1.bf16.msra.mxu0 0
        %1323 = vmatprep.subr.bf16.mxu0 0
        %1324 = vmatpush1.bf16.msra.mxu0 %v1308
        %1325 = vmatprep.subr.bf16.mxu0 0
        %1326 = vmatpush1.bf16.msra.mxu0 %v1307
        %1327 = vmatprep.subr.bf16.mxu0 0
        %1328 = vmatpush2.bf16.msra.mxu0 0
        %1329 = vmatprep.subr.bf16.mxu0 0
        %1330 = vmatpush2.bf16.msra.mxu0 0
        %1331 = vmatprep.subr.bf16.mxu0 0
        %1332 = vmatpush2.bf16.msra.mxu0 0
        %1333 = vmatprep.subr.bf16.mxu0 0
        %1334 = vmatpush2.bf16.msra.mxu0 0
        %1335 = vmatprep.subr.bf16.mxu0 0
        %1336 = vmatpush2.bf16.msra.mxu0 0
        %1337 = vmatprep.subr.bf16.mxu0 0
        %1338 = vmatpush2.bf16.msra.mxu0 0
        %1339 = vmatprep.subr.bf16.mxu0 0
        %1340 = vmatpush2.bf16.msra.mxu0 0
        %1341 = vmatprep.subr.bf16.mxu0 0
        %1342 = vmatpush2.bf16.msra.mxu0 0
        %1343 = vmatprep.mubr.bf16.mxu0 0
        %1344 = vmatmul.mubr.bf16.gmra.mxu0 %v701
        %v1345 = vpop.f32.mrf.mxu0
        %v1346 = vadd.f32 %v1186, %v1345
        %v1347 = vpop.f32.mrf.mxu0
        %v1348 = vpop.f32.mrf.mxu0
        %v1349 = vpop.f32.mrf.mxu0
        %1350 = vdwg.mxu0
        %v1355 = vunpack.c.l.b16 %v1163
        %v1356 = vunpack.c.l.b16 %v1164
        %v1357 = vunpack.c.l.b16 %v1165
        %v1358 = vunpack.c.l.b16 %v1166
        %v1359 = vpack.c.b16 %v1356, %v1355
        %v1360 = vpack.c.b16 %v1358, %v1357
        %1363 = vmatprep.subr.bf16.mxu0 0
        %1364 = vmatpush1.bf16.msra.mxu0 0
        %1365 = vmatprep.subr.bf16.mxu0 0
        %1366 = vmatpush1.bf16.msra.mxu0 0
        %1367 = vmatprep.subr.bf16.mxu0 0
        %1368 = vmatpush1.bf16.msra.mxu0 0
        %1369 = vmatprep.subr.bf16.mxu0 0
        %1370 = vmatpush1.bf16.msra.mxu0 0
        %1371 = vmatprep.subr.bf16.mxu0 0
        %1372 = vmatpush1.bf16.msra.mxu0 0
        %1373 = vmatprep.subr.bf16.mxu0 0
        %1374 = vmatpush1.bf16.msra.mxu0 0
        %1375 = vmatprep.subr.bf16.mxu0 0
        %1376 = vmatpush1.bf16.msra.mxu0 %v1360
        %1377 = vmatprep.subr.bf16.mxu0 0
        %1378 = vmatpush1.bf16.msra.mxu0 %v1359
        %1379 = vmatprep.subr.bf16.mxu0 0
        %1380 = vmatpush2.bf16.msra.mxu0 0
        %1381 = vmatprep.subr.bf16.mxu0 0
        %1382 = vmatpush2.bf16.msra.mxu0 0
        %1383 = vmatprep.subr.bf16.mxu0 0
        %1384 = vmatpush2.bf16.msra.mxu0 0
        %1385 = vmatprep.subr.bf16.mxu0 0
        %1386 = vmatpush2.bf16.msra.mxu0 0
        %1387 = vmatprep.subr.bf16.mxu0 0
        %1388 = vmatpush2.bf16.msra.mxu0 0
        %1389 = vmatprep.subr.bf16.mxu0 0
        %1390 = vmatpush2.bf16.msra.mxu0 0
        %1391 = vmatprep.subr.bf16.mxu0 0
        %1392 = vmatpush2.bf16.msra.mxu0 0
        %1393 = vmatprep.subr.bf16.mxu0 0
        %1394 = vmatpush2.bf16.msra.mxu0 0
        %1395 = vmatprep.mubr.bf16.mxu0 0
        %1396 = vmatmul.mubr.bf16.gmra.mxu0 %v701
        %v1397 = vpop.f32.mrf.mxu0
        %v1398 = vadd.f32 %v1190, %v1397
        %v1399 = vpop.f32.mrf.mxu0
        %v1400 = vpop.f32.mrf.mxu0
        %v1401 = vpop.f32.mrf.mxu0
        %1402 = vdwg.mxu0
        %v1403 = vpack.c.bf16 %v738, %v738
        %v1404 = vpack.c.bf16 %v790, %v790
        %v1405 = vpack.c.bf16 %v842, %v842
        %v1406 = vpack.c.bf16 %v894, %v894
        %v1407 = vpack.c.bf16 %v990, %v990
        %v1408 = vpack.c.bf16 %v1042, %v1042
        %v1409 = vpack.c.bf16 %v1094, %v1094
        %v1410 = vpack.c.bf16 %v1146, %v1146
        %v1411 = vld [vmem:[%s609] sm:$0x1]
        %v1413 = vlaneseq
        %v1414 = vshrl.u32 %v1413, 7
        %v1415 = vsub.s32 0, %v1414
        %v1416 = vrot.slane %v1411, %v1415
        %vm1418 = vcmask 64512
        %v1420 = vsel %vm1418, %v1403, 0
        %v1423 = vsel %vm1418, %v1407, 0
        %1425 = vmatprep.subr.bf16.mxu0 0
        %1426 = vmatpush1.bf16.xpose.msra.mxu0 0
        %1427 = vmatprep.subr.bf16.mxu0 0
        %1428 = vmatpush1.bf16.xpose.msra.mxu0 0
        %1429 = vmatprep.subr.bf16.mxu0 0
        %1430 = vmatpush1.bf16.xpose.msra.mxu0 0
        %1431 = vmatprep.subr.bf16.mxu0 0
        %1432 = vmatpush1.bf16.xpose.msra.mxu0 0
        %1433 = vmatprep.subr.bf16.mxu0 0
        %1434 = vmatpush1.bf16.xpose.msra.mxu0 0
        %1435 = vmatprep.subr.bf16.mxu0 0
        %1436 = vmatpush1.bf16.xpose.msra.mxu0 0
        %1437 = vmatprep.subr.bf16.mxu0 0
        %1438 = vmatpush1.bf16.xpose.msra.mxu0 0
        %1439 = vmatprep.subr.bf16.mxu0 0
        %1440 = vmatpush1.bf16.xpose.msra.mxu0 %v1423
        %1441 = vmatprep.subr.bf16.mxu0 0
        %1442 = vmatpush2.bf16.xpose.msra.mxu0 0
        %1443 = vmatprep.subr.bf16.mxu0 0
        %1444 = vmatpush2.bf16.xpose.msra.mxu0 0
        %1445 = vmatprep.subr.bf16.mxu0 0
        %1446 = vmatpush2.bf16.xpose.msra.mxu0 0
        %1447 = vmatprep.subr.bf16.mxu0 0
        %1448 = vmatpush2.bf16.xpose.msra.mxu0 0
        %1449 = vmatprep.subr.bf16.mxu0 0
        %1450 = vmatpush2.bf16.xpose.msra.mxu0 0
        %1451 = vmatprep.subr.bf16.mxu0 0
        %1452 = vmatpush2.bf16.xpose.msra.mxu0 0
        %1453 = vmatprep.subr.bf16.mxu0 0
        %1454 = vmatpush2.bf16.xpose.msra.mxu0 0
        %1455 = vmatprep.subr.bf16.mxu0 0
        %1456 = vmatpush2.bf16.xpose.msra.mxu0 0
        %1457 = vmatprep.mubr.bf16.mxu0 0
        %1458 = vmatmul.mubr.bf16.gmra.mxu0 %v1420
        %v1459 = vpop.f32.mrf.mxu0
        %v1460 = vadd.f32 %v1416, %v1459
        %v1461 = vpop.f32.mrf.mxu0
        %v1462 = vpop.f32.mrf.mxu0
        %v1463 = vpop.f32.mrf.mxu0
        %1464 = vdwg.mxu0
        %v1466 = vsel %vm1418, %v1404, 0
        %v1469 = vsel %vm1418, %v1408, 0
        %1471 = vmatprep.subr.bf16.mxu0 0
        %1472 = vmatpush1.bf16.xpose.msra.mxu0 0
        %1473 = vmatprep.subr.bf16.mxu0 0
        %1474 = vmatpush1.bf16.xpose.msra.mxu0 0
        %1475 = vmatprep.subr.bf16.mxu0 0
        %1476 = vmatpush1.bf16.xpose.msra.mxu0 0
        %1477 = vmatprep.subr.bf16.mxu0 0
        %1478 = vmatpush1.bf16.xpose.msra.mxu0 0
        %1479 = vmatprep.subr.bf16.mxu0 0
        %1480 = vmatpush1.bf16.xpose.msra.mxu0 0
        %1481 = vmatprep.subr.bf16.mxu0 0
        %1482 = vmatpush1.bf16.xpose.msra.mxu0 0
        %1483 = vmatprep.subr.bf16.mxu0 0
        %1484 = vmatpush1.bf16.xpose.msra.mxu0 0
        %1485 = vmatprep.subr.bf16.mxu0 0
        %1486 = vmatpush1.bf16.xpose.msra.mxu0 %v1469
        %1487 = vmatprep.subr.bf16.mxu0 0
        %1488 = vmatpush2.bf16.xpose.msra.mxu0 0
        %1489 = vmatprep.subr.bf16.mxu0 0
        %1490 = vmatpush2.bf16.xpose.msra.mxu0 0
        %1491 = vmatprep.subr.bf16.mxu0 0
        %1492 = vmatpush2.bf16.xpose.msra.mxu0 0
        %1493 = vmatprep.subr.bf16.mxu0 0
        %1494 = vmatpush2.bf16.xpose.msra.mxu0 0
        %1495 = vmatprep.subr.bf16.mxu0 0
        %1496 = vmatpush2.bf16.xpose.msra.mxu0 0
        %1497 = vmatprep.subr.bf16.mxu0 0
        %1498 = vmatpush2.bf16.xpose.msra.mxu0 0
        %1499 = vmatprep.subr.bf16.mxu0 0
        %1500 = vmatpush2.bf16.xpose.msra.mxu0 0
        %1501 = vmatprep.subr.bf16.mxu0 0
        %1502 = vmatpush2.bf16.xpose.msra.mxu0 0
        %1503 = vmatprep.mubr.bf16.mxu0 0
        %1504 = vmatmul.mubr.bf16.gmra.mxu0 %v1466
        %v1505 = vpop.f32.mrf.mxu0
        %v1506 = vadd.f32 %v1416, %v1505
        %v1507 = vpop.f32.mrf.mxu0
        %v1508 = vpop.f32.mrf.mxu0
        %v1509 = vpop.f32.mrf.mxu0
        %1510 = vdwg.mxu0
        %v1512 = vsel %vm1418, %v1405, 0
        %v1515 = vsel %vm1418, %v1409, 0
        %1517 = vmatprep.subr.bf16.mxu0 0
        %1518 = vmatpush1.bf16.xpose.msra.mxu0 0
        %1519 = vmatprep.subr.bf16.mxu0 0
        %1520 = vmatpush1.bf16.xpose.msra.mxu0 0
        %1521 = vmatprep.subr.bf16.mxu0 0
        %1522 = vmatpush1.bf16.xpose.msra.mxu0 0
        %1523 = vmatprep.subr.bf16.mxu0 0
        %1524 = vmatpush1.bf16.xpose.msra.mxu0 0
        %1525 = vmatprep.subr.bf16.mxu0 0
        %1526 = vmatpush1.bf16.xpose.msra.mxu0 0
        %1527 = vmatprep.subr.bf16.mxu0 0
        %1528 = vmatpush1.bf16.xpose.msra.mxu0 0
        %1529 = vmatprep.subr.bf16.mxu0 0
        %1530 = vmatpush1.bf16.xpose.msra.mxu0 0
        %1531 = vmatprep.subr.bf16.mxu0 0
        %1532 = vmatpush1.bf16.xpose.msra.mxu0 %v1515
        %1533 = vmatprep.subr.bf16.mxu0 0
        %1534 = vmatpush2.bf16.xpose.msra.mxu0 0
        %1535 = vmatprep.subr.bf16.mxu0 0
        %1536 = vmatpush2.bf16.xpose.msra.mxu0 0
        %1537 = vmatprep.subr.bf16.mxu0 0
        %1538 = vmatpush2.bf16.xpose.msra.mxu0 0
        %1539 = vmatprep.subr.bf16.mxu0 0
        %1540 = vmatpush2.bf16.xpose.msra.mxu0 0
        %1541 = vmatprep.subr.bf16.mxu0 0
        %1542 = vmatpush2.bf16.xpose.msra.mxu0 0
        %1543 = vmatprep.subr.bf16.mxu0 0
        %1544 = vmatpush2.bf16.xpose.msra.mxu0 0
        %1545 = vmatprep.subr.bf16.mxu0 0
        %1546 = vmatpush2.bf16.xpose.msra.mxu0 0
        %1547 = vmatprep.subr.bf16.mxu0 0
        %1548 = vmatpush2.bf16.xpose.msra.mxu0 0
        %1549 = vmatprep.mubr.bf16.mxu0 0
        %1550 = vmatmul.mubr.bf16.gmra.mxu0 %v1512
        %v1551 = vpop.f32.mrf.mxu0
        %v1552 = vadd.f32 %v1416, %v1551
        %v1553 = vpop.f32.mrf.mxu0
        %v1554 = vpop.f32.mrf.mxu0
        %v1555 = vpop.f32.mrf.mxu0
        %1556 = vdwg.mxu0
        %v1558 = vsel %vm1418, %v1406, 0
        %v1561 = vsel %vm1418, %v1410, 0
        %1563 = vmatprep.subr.bf16.mxu0 0
        %1564 = vmatpush1.bf16.xpose.msra.mxu0 0
        %1565 = vmatprep.subr.bf16.mxu0 0
        %1566 = vmatpush1.bf16.xpose.msra.mxu0 0
        %1567 = vmatprep.subr.bf16.mxu0 0
        %1568 = vmatpush1.bf16.xpose.msra.mxu0 0
        %1569 = vmatprep.subr.bf16.mxu0 0
        %1570 = vmatpush1.bf16.xpose.msra.mxu0 0
        %1571 = vmatprep.subr.bf16.mxu0 0
        %1572 = vmatpush1.bf16.xpose.msra.mxu0 0
        %1573 = vmatprep.subr.bf16.mxu0 0
        %1574 = vmatpush1.bf16.xpose.msra.mxu0 0
        %1575 = vmatprep.subr.bf16.mxu0 0
        %1576 = vmatpush1.bf16.xpose.msra.mxu0 0
        %1577 = vmatprep.subr.bf16.mxu0 0
        %1578 = vmatpush1.bf16.xpose.msra.mxu0 %v1561
        %1579 = vmatprep.subr.bf16.mxu0 0
        %1580 = vmatpush2.bf16.xpose.msra.mxu0 0
        %1581 = vmatprep.subr.bf16.mxu0 0
        %1582 = vmatpush2.bf16.xpose.msra.mxu0 0
        %1583 = vmatprep.subr.bf16.mxu0 0
        %1584 = vmatpush2.bf16.xpose.msra.mxu0 0
        %1585 = vmatprep.subr.bf16.mxu0 0
        %1586 = vmatpush2.bf16.xpose.msra.mxu0 0
        %1587 = vmatprep.subr.bf16.mxu0 0
        %1588 = vmatpush2.bf16.xpose.msra.mxu0 0
        %1589 = vmatprep.subr.bf16.mxu0 0
        %1590 = vmatpush2.bf16.xpose.msra.mxu0 0
        %1591 = vmatprep.subr.bf16.mxu0 0
        %1592 = vmatpush2.bf16.xpose.msra.mxu0 0
        %1593 = vmatprep.subr.bf16.mxu0 0
        %1594 = vmatpush2.bf16.xpose.msra.mxu0 0
        %1595 = vmatprep.mubr.bf16.mxu0 0
        %1596 = vmatmul.mubr.bf16.gmra.mxu0 %v1558
        %v1597 = vpop.f32.mrf.mxu0
        %v1598 = vadd.f32 %v1416, %v1597
        %v1599 = vpop.f32.mrf.mxu0
        %v1600 = vpop.f32.mrf.mxu0
        %v1601 = vpop.f32.mrf.mxu0
        %1602 = vdwg.mxu0
        %v1603 = vsel %vm1418, %v1460, -inf
        %1604 = vmax.xlane.f32.xlu0 %v1603
        %v1605 = vpop.xlane.xlu0 %1604
        %v1606 = vsel %vm1418, %v1506, -inf
        %1607 = vmax.xlane.f32.xlu0 %v1606
        %v1608 = vpop.xlane.xlu0 %1607
        %v1609 = vsel %vm1418, %v1552, -inf
        %1610 = vmax.xlane.f32.xlu0 %v1609
        %v1611 = vpop.xlane.xlu0 %1610
        %v1612 = vsel %vm1418, %v1598, -inf
        %1613 = vmax.xlane.f32.xlu0 %v1612
        %v1614 = vpop.xlane.xlu0 %1613
        %v1615 = vsub.f32 %v1460, %v1605
        %v1616 = vsub.f32 %v1506, %v1608
        %v1617 = vsub.f32 %v1552, %v1611
        %v1618 = vsub.f32 %v1598, %v1614
        %v1619 = vmul.f32 %v1615, 1.442695
        %v1620 = vpow.pop %v1619
        %v1621 = vmul.f32 %v1616, 1.442695
        %v1622 = vpow.pop %v1621
        %v1623 = vmul.f32 %v1617, 1.442695
        %v1624 = vpow.pop %v1623
        %v1625 = vmul.f32 %v1618, 1.442695
        %v1626 = vpow.pop %v1625
        %v1627 = vsel %vm1418, %v1620, 0.0
        %1628 = vadd.xlane.f32.xlu0 %v1627
        %v1629 = vpop.xlane.xlu0 %1628
        %v1630 = vsel %vm1418, %v1622, 0.0
        %1631 = vadd.xlane.f32.xlu0 %v1630
        %v1632 = vpop.xlane.xlu0 %1631
        %v1633 = vsel %vm1418, %v1624, 0.0
        %1634 = vadd.xlane.f32.xlu0 %v1633
        %v1635 = vpop.xlane.xlu0 %1634
        %v1636 = vsel %vm1418, %v1626, 0.0
        %1637 = vadd.xlane.f32.xlu0 %v1636
        %v1638 = vpop.xlane.xlu0 %1637
        %v1639 = vrcp.pop %v1629
        %v1640 = vrcp.pop %v1632
        %v1641 = vrcp.pop %v1635
        %v1642 = vrcp.pop %v1638
        %v1643 = vmul.f32 %v1620, %v1639
        %v1644 = vmul.f32 %v1622, %v1640
        %v1645 = vmul.f32 %v1624, %v1641
        %v1646 = vmul.f32 %v1626, %v1642
        %v1647 = vpack.c.bf16 %v1643, %v1643
        %v1648 = vpack.c.bf16 %v1644, %v1644
        %v1649 = vpack.c.bf16 %v1645, %v1645
        %v1650 = vpack.c.bf16 %v1646, %v1646
        %v1651 = vpack.c.bf16 %v1242, %v1242
        %v1652 = vpack.c.bf16 %v1294, %v1294
        %v1653 = vpack.c.bf16 %v1346, %v1346
        %v1654 = vpack.c.bf16 %v1398, %v1398
        %v1656 = vsel %vm1418, %v1647, 0
        %vm1658 = vcmask 1043456
        %v1660 = vsel %vm1658, %v1651, 0
        %1662 = vmatprep.subr.bf16.mxu0 0
        %1663 = vmatpush1.bf16.msra.mxu0 0
        %1664 = vmatprep.subr.bf16.mxu0 0
        %1665 = vmatpush1.bf16.msra.mxu0 0
        %1666 = vmatprep.subr.bf16.mxu0 0
        %1667 = vmatpush1.bf16.msra.mxu0 0
        %1668 = vmatprep.subr.bf16.mxu0 0
        %1669 = vmatpush1.bf16.msra.mxu0 0
        %1670 = vmatprep.subr.bf16.mxu0 0
        %1671 = vmatpush1.bf16.msra.mxu0 0
        %1672 = vmatprep.subr.bf16.mxu0 0
        %1673 = vmatpush1.bf16.msra.mxu0 0
        %1674 = vmatprep.subr.bf16.mxu0 0
        %1675 = vmatpush1.bf16.msra.mxu0 0
        %1676 = vmatprep.subr.bf16.mxu0 0
        %1677 = vmatpush1.bf16.msra.mxu0 %v1660
        %1678 = vmatprep.subr.bf16.mxu0 0
        %1679 = vmatpush2.bf16.msra.mxu0 0
        %1680 = vmatprep.subr.bf16.mxu0 0
        %1681 = vmatpush2.bf16.msra.mxu0 0
        %1682 = vmatprep.subr.bf16.mxu0 0
        %1683 = vmatpush2.bf16.msra.mxu0 0
        %1684 = vmatprep.subr.bf16.mxu0 0
        %1685 = vmatpush2.bf16.msra.mxu0 0
        %1686 = vmatprep.subr.bf16.mxu0 0
        %1687 = vmatpush2.bf16.msra.mxu0 0
        %1688 = vmatprep.subr.bf16.mxu0 0
        %1689 = vmatpush2.bf16.msra.mxu0 0
        %1690 = vmatprep.subr.bf16.mxu0 0
        %1691 = vmatpush2.bf16.msra.mxu0 0
        %1692 = vmatprep.subr.bf16.mxu0 0
        %1693 = vmatpush2.bf16.msra.mxu0 0
        %1694 = vmatprep.mubr.bf16.mxu0 0
        %1695 = vmatmul.mubr.bf16.gmra.mxu0 %v1656
        %v1696 = vpop.f32.mrf.mxu0
        %v1697 = vadd.f32 0.0, %v1696
        %v1698 = vpop.f32.mrf.mxu0
        %v1699 = vpop.f32.mrf.mxu0
        %v1700 = vpop.f32.mrf.mxu0
        %1701 = vdwg.mxu0
        %v1703 = vsel %vm1418, %v1648, 0
        %v1706 = vsel %vm1658, %v1652, 0
        %1708 = vmatprep.subr.bf16.mxu0 0
        %1709 = vmatpush1.bf16.msra.mxu0 0
        %1710 = vmatprep.subr.bf16.mxu0 0
        %1711 = vmatpush1.bf16.msra.mxu0 0
        %1712 = vmatprep.subr.bf16.mxu0 0
        %1713 = vmatpush1.bf16.msra.mxu0 0
        %1714 = vmatprep.subr.bf16.mxu0 0
        %1715 = vmatpush1.bf16.msra.mxu0 0
        %1716 = vmatprep.subr.bf16.mxu0 0
        %1717 = vmatpush1.bf16.msra.mxu0 0
        %1718 = vmatprep.subr.bf16.mxu0 0
        %1719 = vmatpush1.bf16.msra.mxu0 0
        %1720 = vmatprep.subr.bf16.mxu0 0
        %1721 = vmatpush1.bf16.msra.mxu0 0
        %1722 = vmatprep.subr.bf16.mxu0 0
        %1723 = vmatpush1.bf16.msra.mxu0 %v1706
        %1724 = vmatprep.subr.bf16.mxu0 0
        %1725 = vmatpush2.bf16.msra.mxu0 0
        %1726 = vmatprep.subr.bf16.mxu0 0
        %1727 = vmatpush2.bf16.msra.mxu0 0
        %1728 = vmatprep.subr.bf16.mxu0 0
        %1729 = vmatpush2.bf16.msra.mxu0 0
        %1730 = vmatprep.subr.bf16.mxu0 0
        %1731 = vmatpush2.bf16.msra.mxu0 0
        %1732 = vmatprep.subr.bf16.mxu0 0
        %1733 = vmatpush2.bf16.msra.mxu0 0
        %1734 = vmatprep.subr.bf16.mxu0 0
        %1735 = vmatpush2.bf16.msra.mxu0 0
        %1736 = vmatprep.subr.bf16.mxu0 0
        %1737 = vmatpush2.bf16.msra.mxu0 0
        %1738 = vmatprep.subr.bf16.mxu0 0
        %1739 = vmatpush2.bf16.msra.mxu0 0
        %1740 = vmatprep.mubr.bf16.mxu0 0
        %1741 = vmatmul.mubr.bf16.gmra.mxu0 %v1703
        %v1742 = vpop.f32.mrf.mxu0
        %v1743 = vadd.f32 0.0, %v1742
        %v1744 = vpop.f32.mrf.mxu0
        %v1745 = vpop.f32.mrf.mxu0
        %v1746 = vpop.f32.mrf.mxu0
        %1747 = vdwg.mxu0
        %v1749 = vsel %vm1418, %v1649, 0
        %v1752 = vsel %vm1658, %v1653, 0
        %1754 = vmatprep.subr.bf16.mxu0 0
        %1755 = vmatpush1.bf16.msra.mxu0 0
        %1756 = vmatprep.subr.bf16.mxu0 0
        %1757 = vmatpush1.bf16.msra.mxu0 0
        %1758 = vmatprep.subr.bf16.mxu0 0
        %1759 = vmatpush1.bf16.msra.mxu0 0
        %1760 = vmatprep.subr.bf16.mxu0 0
        %1761 = vmatpush1.bf16.msra.mxu0 0
        %1762 = vmatprep.subr.bf16.mxu0 0
        %1763 = vmatpush1.bf16.msra.mxu0 0
        %1764 = vmatprep.subr.bf16.mxu0 0
        %1765 = vmatpush1.bf16.msra.mxu0 0
        %1766 = vmatprep.subr.bf16.mxu0 0
        %1767 = vmatpush1.bf16.msra.mxu0 0
        %1768 = vmatprep.subr.bf16.mxu0 0
        %1769 = vmatpush1.bf16.msra.mxu0 %v1752
        %1770 = vmatprep.subr.bf16.mxu0 0
        %1771 = vmatpush2.bf16.msra.mxu0 0
        %1772 = vmatprep.subr.bf16.mxu0 0
        %1773 = vmatpush2.bf16.msra.mxu0 0
        %1774 = vmatprep.subr.bf16.mxu0 0
        %1775 = vmatpush2.bf16.msra.mxu0 0
        %1776 = vmatprep.subr.bf16.mxu0 0
        %1777 = vmatpush2.bf16.msra.mxu0 0
        %1778 = vmatprep.subr.bf16.mxu0 0
        %1779 = vmatpush2.bf16.msra.mxu0 0
        %1780 = vmatprep.subr.bf16.mxu0 0
        %1781 = vmatpush2.bf16.msra.mxu0 0
        %1782 = vmatprep.subr.bf16.mxu0 0
        %1783 = vmatpush2.bf16.msra.mxu0 0
        %1784 = vmatprep.subr.bf16.mxu0 0
        %1785 = vmatpush2.bf16.msra.mxu0 0
        %1786 = vmatprep.mubr.bf16.mxu0 0
        %1787 = vmatmul.mubr.bf16.gmra.mxu0 %v1749
        %v1788 = vpop.f32.mrf.mxu0
        %v1789 = vadd.f32 0.0, %v1788
        %v1790 = vpop.f32.mrf.mxu0
        %v1791 = vpop.f32.mrf.mxu0
        %v1792 = vpop.f32.mrf.mxu0
        %1793 = vdwg.mxu0
        %v1795 = vsel %vm1418, %v1650, 0
        %v1798 = vsel %vm1658, %v1654, 0
        %1800 = vmatprep.subr.bf16.mxu0 0
        %1801 = vmatpush1.bf16.msra.mxu0 0
        %1802 = vmatprep.subr.bf16.mxu0 0
        %1803 = vmatpush1.bf16.msra.mxu0 0
        %1804 = vmatprep.subr.bf16.mxu0 0
        %1805 = vmatpush1.bf16.msra.mxu0 0
        %1806 = vmatprep.subr.bf16.mxu0 0
        %1807 = vmatpush1.bf16.msra.mxu0 0
        %1808 = vmatprep.subr.bf16.mxu0 0
        %1809 = vmatpush1.bf16.msra.mxu0 0
        %1810 = vmatprep.subr.bf16.mxu0 0
        %1811 = vmatpush1.bf16.msra.mxu0 0
        %1812 = vmatprep.subr.bf16.mxu0 0
        %1813 = vmatpush1.bf16.msra.mxu0 0
        %1814 = vmatprep.subr.bf16.mxu0 0
        %1815 = vmatpush1.bf16.msra.mxu0 %v1798
        %1816 = vmatprep.subr.bf16.mxu0 0
        %1817 = vmatpush2.bf16.msra.mxu0 0
        %1818 = vmatprep.subr.bf16.mxu0 0
        %1819 = vmatpush2.bf16.msra.mxu0 0
        %1820 = vmatprep.subr.bf16.mxu0 0
        %1821 = vmatpush2.bf16.msra.mxu0 0
        %1822 = vmatprep.subr.bf16.mxu0 0
        %1823 = vmatpush2.bf16.msra.mxu0 0
        %1824 = vmatprep.subr.bf16.mxu0 0
        %1825 = vmatpush2.bf16.msra.mxu0 0
        %1826 = vmatprep.subr.bf16.mxu0 0
        %1827 = vmatpush2.bf16.msra.mxu0 0
        %1828 = vmatprep.subr.bf16.mxu0 0
        %1829 = vmatpush2.bf16.msra.mxu0 0
        %1830 = vmatprep.subr.bf16.mxu0 0
        %1831 = vmatpush2.bf16.msra.mxu0 0
        %1832 = vmatprep.mubr.bf16.mxu0 0
        %1833 = vmatmul.mubr.bf16.gmra.mxu0 %v1795
        %v1834 = vpop.f32.mrf.mxu0
        %v1835 = vadd.f32 0.0, %v1834
        %v1836 = vpop.f32.mrf.mxu0
        %v1837 = vpop.f32.mrf.mxu0
        %v1838 = vpop.f32.mrf.mxu0
        %1839 = vdwg.mxu0
        %v1840 = vpack.c.bf16 %v1697, %v1697
        %v1841 = vpack.c.bf16 %v1743, %v1743
        %v1842 = vpack.c.bf16 %v1789, %v1789
        %v1843 = vpack.c.bf16 %v1835, %v1835
        %v1844 = vld [vmem:[%s8] sm:$0xf]
        %v1845 = vld [vmem:[%s8 + $0x4] sm:$0xf]
        %v1846 = vld [vmem:[%s8 + $0x8] sm:$0xf]
        %v1847 = vld [vmem:[%s8 + $0xc] sm:$0xf]
        %v1849 = vsel %vm1418, %v1840, 0
        %v1852 = vsel %vm1658, %v1844, 0
        %1854 = vmatprep.subr.bf16.mxu0 0
        %1855 = vmatpush1.bf16.msra.mxu0 0
        %1856 = vmatprep.subr.bf16.mxu0 0
        %1857 = vmatpush1.bf16.msra.mxu0 0
        %1858 = vmatprep.subr.bf16.mxu0 0
        %1859 = vmatpush1.bf16.msra.mxu0 0
        %1860 = vmatprep.subr.bf16.mxu0 0
        %1861 = vmatpush1.bf16.msra.mxu0 0
        %1862 = vmatprep.subr.bf16.mxu0 0
        %1863 = vmatpush1.bf16.msra.mxu0 0
        %1864 = vmatprep.subr.bf16.mxu0 0
        %1865 = vmatpush1.bf16.msra.mxu0 0
        %1866 = vmatprep.subr.bf16.mxu0 0
        %1867 = vmatpush1.bf16.msra.mxu0 0
        %1868 = vmatprep.subr.bf16.mxu0 0
        %1869 = vmatpush1.bf16.msra.mxu0 %v1852
        %1870 = vmatprep.subr.bf16.mxu0 0
        %1871 = vmatpush2.bf16.msra.mxu0 0
        %1872 = vmatprep.subr.bf16.mxu0 0
        %1873 = vmatpush2.bf16.msra.mxu0 0
        %1874 = vmatprep.subr.bf16.mxu0 0
        %1875 = vmatpush2.bf16.msra.mxu0 0
        %1876 = vmatprep.subr.bf16.mxu0 0
        %1877 = vmatpush2.bf16.msra.mxu0 0
        %1878 = vmatprep.subr.bf16.mxu0 0
        %1879 = vmatpush2.bf16.msra.mxu0 0
        %1880 = vmatprep.subr.bf16.mxu0 0
        %1881 = vmatpush2.bf16.msra.mxu0 0
        %1882 = vmatprep.subr.bf16.mxu0 0
        %1883 = vmatpush2.bf16.msra.mxu0 0
        %1884 = vmatprep.subr.bf16.mxu0 0
        %1885 = vmatpush2.bf16.msra.mxu0 0
        %1886 = vmatprep.mubr.bf16.mxu0 0
        %1887 = vmatmul.mubr.bf16.gmra.mxu0 %v1849
        %v1888 = vpop.f32.mrf.mxu0
        %v1889 = vadd.f32 0.0, %v1888
        %v1890 = vpop.f32.mrf.mxu0
        %v1891 = vpop.f32.mrf.mxu0
        %v1892 = vpop.f32.mrf.mxu0
        %1893 = vdwg.mxu0
        %v1895 = vsel %vm1418, %v1841, 0
        %v1898 = vsel %vm1658, %v1845, 0
        %1900 = vmatprep.subr.bf16.mxu0 0
        %1901 = vmatpush1.bf16.msra.mxu0 0
        %1902 = vmatprep.subr.bf16.mxu0 0
        %1903 = vmatpush1.bf16.msra.mxu0 0
        %1904 = vmatprep.subr.bf16.mxu0 0
        %1905 = vmatpush1.bf16.msra.mxu0 0
        %1906 = vmatprep.subr.bf16.mxu0 0
        %1907 = vmatpush1.bf16.msra.mxu0 0
        %1908 = vmatprep.subr.bf16.mxu0 0
        %1909 = vmatpush1.bf16.msra.mxu0 0
        %1910 = vmatprep.subr.bf16.mxu0 0
        %1911 = vmatpush1.bf16.msra.mxu0 0
        %1912 = vmatprep.subr.bf16.mxu0 0
        %1913 = vmatpush1.bf16.msra.mxu0 0
        %1914 = vmatprep.subr.bf16.mxu0 0
        %1915 = vmatpush1.bf16.msra.mxu0 %v1898
        %1916 = vmatprep.subr.bf16.mxu0 0
        %1917 = vmatpush2.bf16.msra.mxu0 0
        %1918 = vmatprep.subr.bf16.mxu0 0
        %1919 = vmatpush2.bf16.msra.mxu0 0
        %1920 = vmatprep.subr.bf16.mxu0 0
        %1921 = vmatpush2.bf16.msra.mxu0 0
        %1922 = vmatprep.subr.bf16.mxu0 0
        %1923 = vmatpush2.bf16.msra.mxu0 0
        %1924 = vmatprep.subr.bf16.mxu0 0
        %1925 = vmatpush2.bf16.msra.mxu0 0
        %1926 = vmatprep.subr.bf16.mxu0 0
        %1927 = vmatpush2.bf16.msra.mxu0 0
        %1928 = vmatprep.subr.bf16.mxu0 0
        %1929 = vmatpush2.bf16.msra.mxu0 0
        %1930 = vmatprep.subr.bf16.mxu0 0
        %1931 = vmatpush2.bf16.msra.mxu0 0
        %1932 = vmatprep.mubr.bf16.mxu0 0
        %1933 = vmatmul.mubr.bf16.gmra.mxu0 %v1895
        %v1934 = vpop.f32.mrf.mxu0
        %v1935 = vadd.f32 0.0, %v1934
        %v1936 = vpop.f32.mrf.mxu0
        %v1937 = vpop.f32.mrf.mxu0
        %v1938 = vpop.f32.mrf.mxu0
        %1939 = vdwg.mxu0
        %v1941 = vsel %vm1418, %v1842, 0
        %v1944 = vsel %vm1658, %v1846, 0
        %1946 = vmatprep.subr.bf16.mxu0 0
        %1947 = vmatpush1.bf16.msra.mxu0 0
        %1948 = vmatprep.subr.bf16.mxu0 0
        %1949 = vmatpush1.bf16.msra.mxu0 0
        %1950 = vmatprep.subr.bf16.mxu0 0
        %1951 = vmatpush1.bf16.msra.mxu0 0
        %1952 = vmatprep.subr.bf16.mxu0 0
        %1953 = vmatpush1.bf16.msra.mxu0 0
        %1954 = vmatprep.subr.bf16.mxu0 0
        %1955 = vmatpush1.bf16.msra.mxu0 0
        %1956 = vmatprep.subr.bf16.mxu0 0
        %1957 = vmatpush1.bf16.msra.mxu0 0
        %1958 = vmatprep.subr.bf16.mxu0 0
        %1959 = vmatpush1.bf16.msra.mxu0 0
        %1960 = vmatprep.subr.bf16.mxu0 0
        %1961 = vmatpush1.bf16.msra.mxu0 %v1944
        %1962 = vmatprep.subr.bf16.mxu0 0
        %1963 = vmatpush2.bf16.msra.mxu0 0
        %1964 = vmatprep.subr.bf16.mxu0 0
        %1965 = vmatpush2.bf16.msra.mxu0 0
        %1966 = vmatprep.subr.bf16.mxu0 0
        %1967 = vmatpush2.bf16.msra.mxu0 0
        %1968 = vmatprep.subr.bf16.mxu0 0
        %1969 = vmatpush2.bf16.msra.mxu0 0
        %1970 = vmatprep.subr.bf16.mxu0 0
        %1971 = vmatpush2.bf16.msra.mxu0 0
        %1972 = vmatprep.subr.bf16.mxu0 0
        %1973 = vmatpush2.bf16.msra.mxu0 0
        %1974 = vmatprep.subr.bf16.mxu0 0
        %1975 = vmatpush2.bf16.msra.mxu0 0
        %1976 = vmatprep.subr.bf16.mxu0 0
        %1977 = vmatpush2.bf16.msra.mxu0 0
        %1978 = vmatprep.mubr.bf16.mxu0 0
        %1979 = vmatmul.mubr.bf16.gmra.mxu0 %v1941
        %v1980 = vpop.f32.mrf.mxu0
        %v1981 = vadd.f32 0.0, %v1980
        %v1982 = vpop.f32.mrf.mxu0
        %v1983 = vpop.f32.mrf.mxu0
        %v1984 = vpop.f32.mrf.mxu0
        %1985 = vdwg.mxu0
        %v1987 = vsel %vm1418, %v1843, 0
        %v1990 = vsel %vm1658, %v1847, 0
        %1992 = vmatprep.subr.bf16.mxu0 0
        %1993 = vmatpush1.bf16.msra.mxu0 0
        %1994 = vmatprep.subr.bf16.mxu0 0
        %1995 = vmatpush1.bf16.msra.mxu0 0
        %1996 = vmatprep.subr.bf16.mxu0 0
        %1997 = vmatpush1.bf16.msra.mxu0 0
        %1998 = vmatprep.subr.bf16.mxu0 0
        %1999 = vmatpush1.bf16.msra.mxu0 0
        %2000 = vmatprep.subr.bf16.mxu0 0
        %2001 = vmatpush1.bf16.msra.mxu0 0
        %2002 = vmatprep.subr.bf16.mxu0 0
        %2003 = vmatpush1.bf16.msra.mxu0 0
        %2004 = vmatprep.subr.bf16.mxu0 0
        %2005 = vmatpush1.bf16.msra.mxu0 0
        %2006 = vmatprep.subr.bf16.mxu0 0
        %2007 = vmatpush1.bf16.msra.mxu0 %v1990
        %2008 = vmatprep.subr.bf16.mxu0 0
        %2009 = vmatpush2.bf16.msra.mxu0 0
        %2010 = vmatprep.subr.bf16.mxu0 0
        %2011 = vmatpush2.bf16.msra.mxu0 0
        %2012 = vmatprep.subr.bf16.mxu0 0
        %2013 = vmatpush2.bf16.msra.mxu0 0
        %2014 = vmatprep.subr.bf16.mxu0 0
        %2015 = vmatpush2.bf16.msra.mxu0 0
        %2016 = vmatprep.subr.bf16.mxu0 0
        %2017 = vmatpush2.bf16.msra.mxu0 0
        %2018 = vmatprep.subr.bf16.mxu0 0
        %2019 = vmatpush2.bf16.msra.mxu0 0
        %2020 = vmatprep.subr.bf16.mxu0 0
        %2021 = vmatpush2.bf16.msra.mxu0 0
        %2022 = vmatprep.subr.bf16.mxu0 0
        %2023 = vmatpush2.bf16.msra.mxu0 0
        %2024 = vmatprep.mubr.bf16.mxu0 0
        %2025 = vmatmul.mubr.bf16.gmra.mxu0 %v1987
        %v2026 = vpop.f32.mrf.mxu0
        %v2027 = vadd.f32 0.0, %v2026
        %v2028 = vpop.f32.mrf.mxu0
        %v2029 = vpop.f32.mrf.mxu0
        %v2030 = vpop.f32.mrf.mxu0
        %2031 = vdwg.mxu0
        %v2032 = vsel %vm614, %v1889, 0.0
        %v2033 = vsel %vm614, %v1935, 0.0
        %v2034 = vadd.f32 %v2032, %v2033
        %v2035 = vsel %vm614, %v1981, 0.0
        %v2036 = vadd.f32 %v2034, %v2035
        %v2037 = vsel %vm614, %v2027, 0.0
        %v2038 = vadd.f32 %v2036, %v2037
        %v2039 = vld [vmem:[%s9] sm:$0x1]
        %v2041 = vlaneseq
        %v2042 = vshrl.u32 %v2041, 7
        %v2043 = vsub.s32 0, %v2042
        %v2044 = vrot.slane %v2039, %v2043
        %v2046 = vadd.f32 %v2038, %v2044
        %v2047 = vadd.f32 %v611, %v2046
        %v2048 = vld [vmem:[%s16] sm:$0x1]
        %v2049 = vld [vmem:[%s17] sm:$0x1]
        %v2050 = vsel %vm614, %v2047, 0.0
        %2051 = vadd.xlane.f32.xlu0 %v2050
        %v2052 = vpop.xlane.xlu0 %2051
        %v2053 = vmul.f32 %v2052, %v618
        %v2054 = vsub.f32 %v2047, %v2053
        %v2055 = vmul.f32 %v2054, %v2054
        %v2056 = vsel %vm614, %v2055, 0.0
        %2057 = vadd.xlane.f32.xlu0 %v2056
        %v2058 = vpop.xlane.xlu0 %2057
        %v2059 = vmul.f32 %v2058, %v618
        %v2060 = vadd.f32 %v2059, 1e-05
        %v2061 = vrsqrt.pop %v2060
        %v2062 = vmul.f32 %v2054, %v2061
        %v2064 = vlaneseq
        %v2065 = vshrl.u32 %v2064, 7
        %v2066 = vsub.s32 0, %v2065
        %v2067 = vrot.slane %v2048, %v2066
        %v2069 = vmul.f32 %v2062, %v2067
        %v2071 = vlaneseq
        %v2072 = vshrl.u32 %v2071, 7
        %v2073 = vsub.s32 0, %v2072
        %v2074 = vrot.slane %v2049, %v2073
        %v2076 = vadd.f32 %v2069, %v2074
        %v2077 = vpack.c.bf16 %v2076, %v2076
        %v2078 = vld [vmem:[%s10] sm:$0xf]
        %v2079 = vld [vmem:[%s10 + $0x4] sm:$0xf]
        %v2080 = vld [vmem:[%s10 + $0x8] sm:$0xf]
        %v2081 = vld [vmem:[%s10 + $0xc] sm:$0xf]
        %v2082 = vld [vmem:[%s11] sm:$0x1]
        %v2084 = vlaneseq
        %v2085 = vshrl.u32 %v2084, 7
        %v2086 = vsub.s32 0, %v2085
        %v2087 = vrot.slane %v2082, %v2086
        %v2093 = vunpack.c.l.b16 %v2078
        %v2094 = vunpack.c.l.b16 %v2079
        %v2095 = vunpack.c.l.b16 %v2080
        %v2096 = vunpack.c.l.b16 %v2081
        %v2097 = vpack.c.b16 %v2094, %v2093
        %v2098 = vpack.c.b16 %v2096, %v2095
        %v2102 = vsel %vm614, %v2077, 0
        %2104 = vmatprep.subr.bf16.mxu0 0
        %2105 = vmatpush1.bf16.msra.mxu0 0
        %2106 = vmatprep.subr.bf16.mxu0 0
        %2107 = vmatpush1.bf16.msra.mxu0 0
        %2108 = vmatprep.subr.bf16.mxu0 0
        %2109 = vmatpush1.bf16.msra.mxu0 0
        %2110 = vmatprep.subr.bf16.mxu0 0
        %2111 = vmatpush1.bf16.msra.mxu0 0
        %2112 = vmatprep.subr.bf16.mxu0 0
        %2113 = vmatpush1.bf16.msra.mxu0 0
        %2114 = vmatprep.subr.bf16.mxu0 0
        %2115 = vmatpush1.bf16.msra.mxu0 0
        %2116 = vmatprep.subr.bf16.mxu0 0
        %2117 = vmatpush1.bf16.msra.mxu0 %v2098
        %2118 = vmatprep.subr.bf16.mxu0 0
        %2119 = vmatpush1.bf16.msra.mxu0 %v2097
        %2120 = vmatprep.subr.bf16.mxu0 0
        %2121 = vmatpush2.bf16.msra.mxu0 0
        %2122 = vmatprep.subr.bf16.mxu0 0
        %2123 = vmatpush2.bf16.msra.mxu0 0
        %2124 = vmatprep.subr.bf16.mxu0 0
        %2125 = vmatpush2.bf16.msra.mxu0 0
        %2126 = vmatprep.subr.bf16.mxu0 0
        %2127 = vmatpush2.bf16.msra.mxu0 0
        %2128 = vmatprep.subr.bf16.mxu0 0
        %2129 = vmatpush2.bf16.msra.mxu0 0
        %2130 = vmatprep.subr.bf16.mxu0 0
        %2131 = vmatpush2.bf16.msra.mxu0 0
        %2132 = vmatprep.subr.bf16.mxu0 0
        %2133 = vmatpush2.bf16.msra.mxu0 0
        %2134 = vmatprep.subr.bf16.mxu0 0
        %2135 = vmatpush2.bf16.msra.mxu0 0
        %2136 = vmatprep.mubr.bf16.mxu0 0
        %2137 = vmatmul.mubr.bf16.gmra.mxu0 %v2102
        %v2138 = vpop.f32.mrf.mxu0
        %v2139 = vadd.f32 %v2087, %v2138
        %v2140 = vpop.f32.mrf.mxu0
        %v2141 = vpop.f32.mrf.mxu0
        %v2142 = vpop.f32.mrf.mxu0
        %2143 = vdwg.mxu0
        %v2144 = vmul.f32 %v2139, 0.5
        %v2145 = vmul.f32 %v2139, 0.044715
        %v2146 = vmul.f32 %v2145, %v2139
        %v2147 = vmul.f32 %v2146, %v2139
        %v2148 = vadd.f32 %v2139, %v2147
        %v2149 = vmul.f32 %v2148, 0.7978846
        %v2150 = vtanh.pop %v2149
        %v2151 = vadd.f32 %v2150, 1.0
        %v2152 = vmul.f32 %v2144, %v2151
        %v2153 = vpack.c.bf16 %v2152, %v2152
        %v2154 = vld [vmem:[%s12] sm:$0xf]
        %v2155 = vld [vmem:[%s12 + $0x4] sm:$0xf]
        %v2156 = vld [vmem:[%s12 + $0x8] sm:$0xf]
        %v2157 = vld [vmem:[%s12 + $0xc] sm:$0xf]
        %v2158 = vld [vmem:[%s12 + $0x10] sm:$0xf]
        %v2159 = vld [vmem:[%s12 + $0x14] sm:$0xf]
        %v2160 = vld [vmem:[%s12 + $0x18] sm:$0xf]
        %v2161 = vld [vmem:[%s12 + $0x1c] sm:$0xf]
        %v2162 = vld [vmem:[%s12 + $0x20] sm:$0xf]
        %v2163 = vld [vmem:[%s12 + $0x24] sm:$0xf]
        %v2164 = vld [vmem:[%s12 + $0x28] sm:$0xf]
        %v2165 = vld [vmem:[%s12 + $0x2c] sm:$0xf]
        %v2166 = vld [vmem:[%s12 + $0x30] sm:$0xf]
        %v2167 = vld [vmem:[%s12 + $0x34] sm:$0xf]
        %v2168 = vld [vmem:[%s12 + $0x38] sm:$0xf]
        %v2169 = vld [vmem:[%s12 + $0x3c] sm:$0xf]
        %v2170 = vld [vmem:[%s13] sm:$0x1]
        %v2172 = vlaneseq
        %v2173 = vshrl.u32 %v2172, 7
        %v2174 = vsub.s32 0, %v2173
        %v2175 = vrot.slane %v2170, %v2174
        %v2193 = vunpack.c.l.b16 %v2154
        %v2194 = vunpack.c.l.b16 %v2155
        %v2195 = vunpack.c.l.b16 %v2156
        %v2196 = vunpack.c.l.b16 %v2157
        %v2197 = vunpack.c.l.b16 %v2158
        %v2198 = vunpack.c.l.b16 %v2159
        %v2199 = vunpack.c.l.b16 %v2160
        %v2200 = vunpack.c.l.b16 %v2161
        %v2201 = vunpack.c.l.b16 %v2162
        %v2202 = vunpack.c.l.b16 %v2163
        %v2203 = vunpack.c.l.b16 %v2164
        %v2204 = vunpack.c.l.b16 %v2165
        %v2205 = vunpack.c.l.b16 %v2166
        %v2206 = vunpack.c.l.b16 %v2167
        %v2207 = vunpack.c.l.b16 %v2168
        %v2208 = vunpack.c.l.b16 %v2169
        %v2209 = vpack.c.b16 %v2194, %v2193
        %v2210 = vpack.c.b16 %v2196, %v2195
        %v2211 = vpack.c.b16 %v2198, %v2197
        %v2212 = vpack.c.b16 %v2200, %v2199
        %v2213 = vpack.c.b16 %v2202, %v2201
        %v2214 = vpack.c.b16 %v2204, %v2203
        %v2215 = vpack.c.b16 %v2206, %v2205
        %v2216 = vpack.c.b16 %v2208, %v2207
        %2225 = vmatprep.subr.bf16.mxu0 0
        %2226 = vmatpush1.bf16.msra.mxu0 %v2216
        %2227 = vmatprep.subr.bf16.mxu0 0
        %2228 = vmatpush1.bf16.msra.mxu0 %v2215
        %2229 = vmatprep.subr.bf16.mxu0 0
        %2230 = vmatpush1.bf16.msra.mxu0 %v2214
        %2231 = vmatprep.subr.bf16.mxu0 0
        %2232 = vmatpush1.bf16.msra.mxu0 %v2213
        %2233 = vmatprep.subr.bf16.mxu0 0
        %2234 = vmatpush1.bf16.msra.mxu0 %v2212
        %2235 = vmatprep.subr.bf16.mxu0 0
        %2236 = vmatpush1.bf16.msra.mxu0 %v2211
        %2237 = vmatprep.subr.bf16.mxu0 0
        %2238 = vmatpush1.bf16.msra.mxu0 %v2210
        %2239 = vmatprep.subr.bf16.mxu0 0
        %2240 = vmatpush1.bf16.msra.mxu0 %v2209
        %2241 = vmatprep.subr.bf16.mxu0 0
        %2242 = vmatpush2.bf16.msra.mxu0 0
        %2243 = vmatprep.subr.bf16.mxu0 0
        %2244 = vmatpush2.bf16.msra.mxu0 0
        %2245 = vmatprep.subr.bf16.mxu0 0
        %2246 = vmatpush2.bf16.msra.mxu0 0
        %2247 = vmatprep.subr.bf16.mxu0 0
        %2248 = vmatpush2.bf16.msra.mxu0 0
        %2249 = vmatprep.subr.bf16.mxu0 0
        %2250 = vmatpush2.bf16.msra.mxu0 0
        %2251 = vmatprep.subr.bf16.mxu0 0
        %2252 = vmatpush2.bf16.msra.mxu0 0
        %2253 = vmatprep.subr.bf16.mxu0 0
        %2254 = vmatpush2.bf16.msra.mxu0 0
        %2255 = vmatprep.subr.bf16.mxu0 0
        %2256 = vmatpush2.bf16.msra.mxu0 0
        %2257 = vmatprep.mubr.bf16.mxu0 0
        %2258 = vmatmul.mubr.bf16.gmra.mxu0 %v2153
        %v2259 = vpop.f32.mrf.mxu0
        %v2260 = vadd.f32 %v2175, %v2259
        %v2261 = vpop.f32.mrf.mxu0
        %v2262 = vpop.f32.mrf.mxu0
        %v2263 = vpop.f32.mrf.mxu0
        %2264 = vdwg.mxu0
        %v2265 = vadd.f32 %v2047, %v2260
        %2266 = vst.msk [vmem:[%s599] sm:$0xff] %vm614, %v2265
        %s2267 = sand.u32 %s444, 1
        %s2268 = scalar_lea.sflag [#allocation3], %s2267
        %s2269 = sand.u32 %s444, 1
        %s2270 = smul.addr %s2269, 8
        %s2271 = scalar_lea.vmem [#allocation2], %s2270
        // Predicated region
        $region93: #{tpu_custom_call.1} parent=91 // pred_check
          %p2272 = pneg %p454
        $region94: #{tpu_custom_call.1} parent=91 // pred_check_branch
          %2274 = sbr.rel (%p2272) target = $region96
        $region95: #{tpu_custom_call.1} parent=91 // pred_region
          %s2276 = ssub.s32 128, 128
          %2277 = vsyncadd %s2268, %s2276
          %s2278 = sadd.s32 %s37, %s36
          %s2279 = smul.addr %s2278, 128
          %s2280 = scalar_lea.hbm %s18, %s2279
          %s2282 = sshll.u32 %s2271, 4
          %s2283 = int_to_ptr.vmem [resolvable:$true] %s2282
          %2285 = dma.vmem_to_hbm [thread:$0]  %s2283, 128, %s2280, %s2268
        $region96: #{tpu_custom_call.1} parent=91 // pred_fallthru
          _
      $region92: #{tpu_custom_call.1} parent=5 // pred_fallthru
        _
      %p2286 = scmp.le.s32.totalorder 2, %s27
      // Predicated region
      $region97: #{tpu_custom_call.1} parent=5 // pred_check
        %p2287 = pneg %p2286
      $region98: #{tpu_custom_call.1} parent=5 // pred_check_branch
        %2289 = sbr.rel (%p2287) target = $region100
      $region99: #{tpu_custom_call.1} parent=5 // pred_region
        %s2290 = ssub.s32 %s27, 2
        // Predicated region
        $region101: #{tpu_custom_call.1} parent=99 // pred_check
          %p2291 = pneg %p460
        $region102: #{tpu_custom_call.1} parent=99 // pred_check_branch
          %2293 = sbr.rel (%p2291) target = $region104
        $region103: #{tpu_custom_call.1} parent=99 // pred_region
          %s2294 = sand.u32 %s445, 1
          %s2295 = scalar_lea.sflag [#allocation3], %s2294
          %s2296 = sand.u32 %s445, 1
          %s2297 = smul.addr %s2296, 8
          %s2298 = scalar_lea.vmem [#allocation2], %s2297
          %2299 = dma.done %s2295, 128
        $region104: #{tpu_custom_call.1} parent=99 // pred_fallthru
          _
      $region100: #{tpu_custom_call.1} parent=5 // pred_fallthru
        _
    $region6: #{tpu_custom_call.1} parent=1 // loop_footer
      %s31 = sadd.s32 1, %s27
    $region7: #{tpu_custom_call.1} parent=1 // loop_footer_branch
      %26 = sbr.rel target = $region3
    $region8: #{tpu_custom_call.1} parent=1 // loop_exit
      _
    %2300 = vsyncpa [#allocation3], 1
    %s2301 = scalar_lea.sflag [#allocation3], 1
    %2302 = vsyncpa %s2301, 1

</llo_original>
